<compile_context>
chip_gen: v7x
topology: tpu7x:2x2x1
jax: 0.10.0
libtpu: 0.0.40
codegen_flags: <defaults>
</compile_context>

<pallas_src>
import jax
import jax.numpy as jnp
from jax.experimental import pallas as pl
from jax.experimental.pallas import tpu as pltpu


def _vq_kernel(emb_ref, z_ref, q_ref, idx_ref, sse_ref):
    """emb_ref: (K, D) f32 in SMEM (whole codebook, resident).
    z_ref:   (1, D, T) block of the (B, D, S) activation, tokens on lanes.
    q_ref:   (1, D, T) quantized output block.
    idx_ref: (1, 1, T) int32 argmin indices.
    sse_ref: (1, 1, T) f32 per-token squared error (== winning distance)."""
    z = z_ref[0].astype(jnp.float32)          # (D, T)
    d_dim, t = z.shape
    k_num = emb_ref.shape[0]

    # Running min / argmin over the K codewords, all on the VPU.
    # Strict '<' keeps the FIRST minimum on ties (matches torch.argmin).
    best = jnp.full((1, t), jnp.inf, dtype=jnp.float32)
    bidx = jnp.zeros((1, t), dtype=jnp.int32)
    for k in range(k_num):
        dist_k = jnp.zeros((1, t), dtype=jnp.float32)
        for d in range(d_dim):
            diff = z[d:d + 1, :] - emb_ref[k, d]      # scalar broadcast from SMEM
            dist_k = dist_k + diff * diff
        take = dist_k < best
        best = jnp.where(take, dist_k, best)
        bidx = jnp.where(take, jnp.int32(k), bidx)

    # Gather the selected codewords with per-channel selects (no MXU gather).
    q_rows = []
    for d in range(d_dim):
        q_d = jnp.zeros((1, t), dtype=jnp.float32)
        for k in range(k_num):
            q_d = jnp.where(bidx == k, emb_ref[k, d], q_d)
        q_rows.append(q_d)
    q = jnp.concatenate(q_rows, axis=0)               # (D, T)

    q_ref[0] = q.astype(q_ref.dtype)
    idx_ref[0] = bidx
    # The minimal distance IS sum_d (q_d - z_d)^2 for the chosen codeword.
    sse_ref[0] = best


def _choose_tile(s, max_tile=2048):
    """Largest multiple-of-128 divisor of s (capped), else the full extent."""
    if s % 128 != 0:
        return s
    best = 128
    t = 128
    while t <= min(s, max_tile):
        if s % t == 0:
            best = t
        t += 128
    return best


def vq_codebook_forward(z_e, embedding, beta=0.25):
    """z_e: (B, C, W, H) float (NCHW, like the PyTorch module).
    embedding: (num_codewords, codebook_dim) float32.
    Returns (quantized_nchw, indices, vq_loss)."""
    b, c, w, h = z_e.shape
    k_num, d = embedding.shape
    if c != d:
        raise RuntimeError("VQ Codebook dimension mismatch!")

    s = w * h
    z3 = z_e.reshape(b, c, s)                 # free reshape, tokens land on lanes
    tile_s = _choose_tile(s)
    grid = (b, s // tile_s)

    q3, idx3, sse3 = pl.pallas_call(
        _vq_kernel,
        grid=grid,
        in_specs=[
            # Whole codebook resident in SMEM, fetched once.
            pl.BlockSpec(memory_space=pltpu.MemorySpace.SMEM),
            pl.BlockSpec((1, c, tile_s), lambda bi, si: (bi, 0, si)),
        ],
        out_specs=(
            pl.BlockSpec((1, c, tile_s), lambda bi, si: (bi, 0, si)),
            pl.BlockSpec((1, 1, tile_s), lambda bi, si: (bi, 0, si)),
            pl.BlockSpec((1, 1, tile_s), lambda bi, si: (bi, 0, si)),
        ),
        out_shape=(
            jax.ShapeDtypeStruct((b, c, s), jnp.float32),
            jax.ShapeDtypeStruct((b, 1, s), jnp.int32),
            jax.ShapeDtypeStruct((b, 1, s), jnp.float32),
        ),
        compiler_params=pltpu.CompilerParams(
            dimension_semantics=("parallel", "parallel")),
    )(embedding, z3)

    quantized = q3.reshape(b, c, w, h)        # already NCHW, no transpose
    indices = idx3.reshape(-1)                # (b, w, h) order == torch order
    # Forward value of mean((q.detach()-z)^2) + beta*mean((q-z.detach())^2)
    vq_loss = (1.0 + beta) * jnp.sum(sse3) / jnp.float32(b * s * d)
    return quantized, indices, vq_loss


if __name__ == "__main__":
    codebook_dim = 4
    num_codewords = 16
    beta = 0.25
    B, C, W, H = 2, codebook_dim, 16, 16

    key = jax.random.PRNGKey(0)
    k_emb, k_in = jax.random.split(key)
    # nn.Embedding weight initialized uniform(-1, 1), shape (num_codewords, codebook_dim)
    embedding = jax.random.uniform(
        k_emb, (num_codewords, codebook_dim), jnp.float32, minval=-1.0, maxval=1.0
    )
    z_e = jax.random.normal(k_in, (B, C, W, H), jnp.float32)

    quantized, indices, vq_loss = vq_codebook_forward(z_e, embedding, beta=beta)
    jax.block_until_ready((quantized, indices, vq_loss))

    # Sanity check against a plain-JAX reference (same math as the torch module).
    z_flat = jnp.transpose(z_e, (0, 2, 3, 1)).reshape(-1, codebook_dim)
    d_ref = (
        jnp.sum(z_flat**2, axis=1, keepdims=True)
        + jnp.sum(embedding**2, axis=1)
        - 2.0 * z_flat @ embedding.T
    )
    idx_ref = jnp.argmin(d_ref, axis=1)
    q_ref = embedding[idx_ref].reshape(B, W, H, C).transpose(0, 3, 1, 2)
    loss_ref = (1.0 + beta) * jnp.mean((q_ref - z_e) ** 2)

    assert jnp.all(indices == idx_ref)
    assert jnp.allclose(quantized, q_ref, atol=1e-5)
    assert jnp.allclose(vq_loss, loss_ref, atol=1e-5)

    print("KERNEL_OK")
</pallas_src>

<mosaic_0001>
module attributes {stable_mosaic.version = 11 : i64} {
  func.func @_vq_kernel(%arg0: i32, %arg1: i32, %arg2: memref<16x4xf32, #tpu.memory_space<smem>>, %arg3: memref<1x4x256xf32, #tpu.memory_space<vmem>>, %arg4: memref<1x4x256xf32, #tpu.memory_space<vmem>>, %arg5: memref<1x1x256xi32, #tpu.memory_space<vmem>>, %arg6: memref<1x1x256xf32, #tpu.memory_space<vmem>>) attributes {dimension_semantics = [#tpu.dimension_semantics<parallel>, #tpu.dimension_semantics<parallel>], iteration_bounds = array<i64: 2, 1>, scalar_prefetch = 0 : i64, scratch_operands = 0 : i64, tpu.core_type = #tpu.core_type<tc>, window_params = [{transform_indices = @transform_0, window_bounds = array<i64: 16, 4>}, {transform_indices = @transform_1, window_bounds = array<i64: 1, 4, 256>}, {transform_indices = @transform_2, window_bounds = array<i64: 1, 4, 256>}, {transform_indices = @transform_3, window_bounds = array<i64: 1, 1, 256>}, {transform_indices = @transform_4, window_bounds = array<i64: 1, 1, 256>}]} {
    %c0 = arith.constant 0 : index
    %c0_0 = arith.constant 0 : index
    %c0_1 = arith.constant 0 : index
    %0 = vector.load %arg3[%c0, %c0_0, %c0_1] : memref<1x4x256xf32, #tpu.memory_space<vmem>>, vector<1x4x256xf32>
    %1 = vector.shape_cast %0 : vector<1x4x256xf32> to vector<4x256xf32>
    %cst = arith.constant 0x7F800000 : f32
    %2 = vector.broadcast %cst : f32 to vector<1x256xf32>
    %c0_i32 = arith.constant 0 : i32
    %3 = vector.broadcast %c0_i32 : i32 to vector<1x256xi32>
    %cst_2 = arith.constant 0.000000e+00 : f32
    %4 = vector.broadcast %cst_2 : f32 to vector<1x256xf32>
    %5 = vector.extract_strided_slice %1 {offsets = [0, 0], sizes = [1, 256], strides = [1, 1]} : vector<4x256xf32> to vector<1x256xf32>
    %c0_3 = arith.constant 0 : index
    %c0_4 = arith.constant 0 : index
    %6 = memref.load %arg2[%c0_3, %c0_4] : memref<16x4xf32, #tpu.memory_space<smem>>
    %7 = vector.broadcast %6 : f32 to vector<1x256xf32>
    %8 = arith.subf %5, %7 : vector<1x256xf32>
    %9 = arith.mulf %8, %8 : vector<1x256xf32>
    %10 = arith.addf %4, %9 : vector<1x256xf32>
    %11 = vector.extract_strided_slice %1 {offsets = [1, 0], sizes = [1, 256], strides = [1, 1]} : vector<4x256xf32> to vector<1x256xf32>
    %c0_5 = arith.constant 0 : index
    %c1 = arith.constant 1 : index
    %12 = memref.load %arg2[%c0_5, %c1] : memref<16x4xf32, #tpu.memory_space<smem>>
    %13 = vector.broadcast %12 : f32 to vector<1x256xf32>
    %14 = arith.subf %11, %13 : vector<1x256xf32>
    %15 = arith.mulf %14, %14 : vector<1x256xf32>
    %16 = arith.addf %10, %15 : vector<1x256xf32>
    %17 = vector.extract_strided_slice %1 {offsets = [2, 0], sizes = [1, 256], strides = [1, 1]} : vector<4x256xf32> to vector<1x256xf32>
    %c0_6 = arith.constant 0 : index
    %c2 = arith.constant 2 : index
    %18 = memref.load %arg2[%c0_6, %c2] : memref<16x4xf32, #tpu.memory_space<smem>>
    %19 = vector.broadcast %18 : f32 to vector<1x256xf32>
    %20 = arith.subf %17, %19 : vector<1x256xf32>
    %21 = arith.mulf %20, %20 : vector<1x256xf32>
    %22 = arith.addf %16, %21 : vector<1x256xf32>
    %23 = vector.extract_strided_slice %1 {offsets = [3, 0], sizes = [1, 256], strides = [1, 1]} : vector<4x256xf32> to vector<1x256xf32>
    %c0_7 = arith.constant 0 : index
    %c3 = arith.constant 3 : index
    %24 = memref.load %arg2[%c0_7, %c3] : memref<16x4xf32, #tpu.memory_space<smem>>
    %25 = vector.broadcast %24 : f32 to vector<1x256xf32>
    %26 = arith.subf %23, %25 : vector<1x256xf32>
    %27 = arith.mulf %26, %26 : vector<1x256xf32>
    %28 = arith.addf %22, %27 : vector<1x256xf32>
    %29 = arith.cmpf olt, %28, %2 : vector<1x256xf32>
    %30 = arith.select %29, %28, %2 : vector<1x256xi1>, vector<1x256xf32>
    %c0_i32_8 = arith.constant 0 : i32
    %31 = vector.broadcast %c0_i32_8 : i32 to vector<1x256xi32>
    %32 = arith.select %29, %31, %3 : vector<1x256xi1>, vector<1x256xi32>
    %cst_9 = arith.constant 0.000000e+00 : f32
    %33 = vector.broadcast %cst_9 : f32 to vector<1x256xf32>
    %34 = vector.extract_strided_slice %1 {offsets = [0, 0], sizes = [1, 256], strides = [1, 1]} : vector<4x256xf32> to vector<1x256xf32>
    %c1_10 = arith.constant 1 : index
    %c0_11 = arith.constant 0 : index
    %35 = memref.load %arg2[%c1_10, %c0_11] : memref<16x4xf32, #tpu.memory_space<smem>>
    %36 = vector.broadcast %35 : f32 to vector<1x256xf32>
    %37 = arith.subf %34, %36 : vector<1x256xf32>
    %38 = arith.mulf %37, %37 : vector<1x256xf32>
    %39 = arith.addf %33, %38 : vector<1x256xf32>
    %40 = vector.extract_strided_slice %1 {offsets = [1, 0], sizes = [1, 256], strides = [1, 1]} : vector<4x256xf32> to vector<1x256xf32>
    %c1_12 = arith.constant 1 : index
    %c1_13 = arith.constant 1 : index
    %41 = memref.load %arg2[%c1_12, %c1_13] : memref<16x4xf32, #tpu.memory_space<smem>>
    %42 = vector.broadcast %41 : f32 to vector<1x256xf32>
    %43 = arith.subf %40, %42 : vector<1x256xf32>
    %44 = arith.mulf %43, %43 : vector<1x256xf32>
    %45 = arith.addf %39, %44 : vector<1x256xf32>
    %46 = vector.extract_strided_slice %1 {offsets = [2, 0], sizes = [1, 256], strides = [1, 1]} : vector<4x256xf32> to vector<1x256xf32>
    %c1_14 = arith.constant 1 : index
    %c2_15 = arith.constant 2 : index
    %47 = memref.load %arg2[%c1_14, %c2_15] : memref<16x4xf32, #tpu.memory_space<smem>>
    %48 = vector.broadcast %47 : f32 to vector<1x256xf32>
    %49 = arith.subf %46, %48 : vector<1x256xf32>
    %50 = arith.mulf %49, %49 : vector<1x256xf32>
    %51 = arith.addf %45, %50 : vector<1x256xf32>
    %52 = vector.extract_strided_slice %1 {offsets = [3, 0], sizes = [1, 256], strides = [1, 1]} : vector<4x256xf32> to vector<1x256xf32>
    %c1_16 = arith.constant 1 : index
    %c3_17 = arith.constant 3 : index
    %53 = memref.load %arg2[%c1_16, %c3_17] : memref<16x4xf32, #tpu.memory_space<smem>>
    %54 = vector.broadcast %53 : f32 to vector<1x256xf32>
    %55 = arith.subf %52, %54 : vector<1x256xf32>
    %56 = arith.mulf %55, %55 : vector<1x256xf32>
    %57 = arith.addf %51, %56 : vector<1x256xf32>
    %58 = arith.cmpf olt, %57, %30 : vector<1x256xf32>
    %59 = arith.select %58, %57, %30 : vector<1x256xi1>, vector<1x256xf32>
    %c1_i32 = arith.constant 1 : i32
    %60 = vector.broadcast %c1_i32 : i32 to vector<1x256xi32>
    %61 = arith.select %58, %60, %32 : vector<1x256xi1>, vector<1x256xi32>
    %cst_18 = arith.constant 0.000000e+00 : f32
    %62 = vector.broadcast %cst_18 : f32 to vector<1x256xf32>
    %63 = vector.extract_strided_slice %1 {offsets = [0, 0], sizes = [1, 256], strides = [1, 1]} : vector<4x256xf32> to vector<1x256xf32>
    %c2_19 = arith.constant 2 : index
    %c0_20 = arith.constant 0 : index
    %64 = memref.load %arg2[%c2_19, %c0_20] : memref<16x4xf32, #tpu.memory_space<smem>>
    %65 = vector.broadcast %64 : f32 to vector<1x256xf32>
    %66 = arith.subf %63, %65 : vector<1x256xf32>
    %67 = arith.mulf %66, %66 : vector<1x256xf32>
    %68 = arith.addf %62, %67 : vector<1x256xf32>
    %69 = vector.extract_strided_slice %1 {offsets = [1, 0], sizes = [1, 256], strides = [1, 1]} : vector<4x256xf32> to vector<1x256xf32>
    %c2_21 = arith.constant 2 : index
    %c1_22 = arith.constant 1 : index
    %70 = memref.load %arg2[%c2_21, %c1_22] : memref<16x4xf32, #tpu.memory_space<smem>>
    %71 = vector.broadcast %70 : f32 to vector<1x256xf32>
    %72 = arith.subf %69, %71 : vector<1x256xf32>
    %73 = arith.mulf %72, %72 : vector<1x256xf32>
    %74 = arith.addf %68, %73 : vector<1x256xf32>
    %75 = vector.extract_strided_slice %1 {offsets = [2, 0], sizes = [1, 256], strides = [1, 1]} : vector<4x256xf32> to vector<1x256xf32>
    %c2_23 = arith.constant 2 : index
    %c2_24 = arith.constant 2 : index
    %76 = memref.load %arg2[%c2_23, %c2_24] : memref<16x4xf32, #tpu.memory_space<smem>>
    %77 = vector.broadcast %76 : f32 to vector<1x256xf32>
    %78 = arith.subf %75, %77 : vector<1x256xf32>
    %79 = arith.mulf %78, %78 : vector<1x256xf32>
    %80 = arith.addf %74, %79 : vector<1x256xf32>
    %81 = vector.extract_strided_slice %1 {offsets = [3, 0], sizes = [1, 256], strides = [1, 1]} : vector<4x256xf32> to vector<1x256xf32>
    %c2_25 = arith.constant 2 : index
    %c3_26 = arith.constant 3 : index
    %82 = memref.load %arg2[%c2_25, %c3_26] : memref<16x4xf32, #tpu.memory_space<smem>>
    %83 = vector.broadcast %82 : f32 to vector<1x256xf32>
    %84 = arith.subf %81, %83 : vector<1x256xf32>
    %85 = arith.mulf %84, %84 : vector<1x256xf32>
    %86 = arith.addf %80, %85 : vector<1x256xf32>
    %87 = arith.cmpf olt, %86, %59 : vector<1x256xf32>
    %88 = arith.select %87, %86, %59 : vector<1x256xi1>, vector<1x256xf32>
    %c2_i32 = arith.constant 2 : i32
    %89 = vector.broadcast %c2_i32 : i32 to vector<1x256xi32>
    %90 = arith.select %87, %89, %61 : vector<1x256xi1>, vector<1x256xi32>
    %cst_27 = arith.constant 0.000000e+00 : f32
    %91 = vector.broadcast %cst_27 : f32 to vector<1x256xf32>
    %92 = vector.extract_strided_slice %1 {offsets = [0, 0], sizes = [1, 256], strides = [1, 1]} : vector<4x256xf32> to vector<1x256xf32>
    %c3_28 = arith.constant 3 : index
    %c0_29 = arith.constant 0 : index
    %93 = memref.load %arg2[%c3_28, %c0_29] : memref<16x4xf32, #tpu.memory_space<smem>>
    %94 = vector.broadcast %93 : f32 to vector<1x256xf32>
    %95 = arith.subf %92, %94 : vector<1x256xf32>
    %96 = arith.mulf %95, %95 : vector<1x256xf32>
    %97 = arith.addf %91, %96 : vector<1x256xf32>
    %98 = vector.extract_strided_slice %1 {offsets = [1, 0], sizes = [1, 256], strides = [1, 1]} : vector<4x256xf32> to vector<1x256xf32>
    %c3_30 = arith.constant 3 : index
    %c1_31 = arith.constant 1 : index
    %99 = memref.load %arg2[%c3_30, %c1_31] : memref<16x4xf32, #tpu.memory_space<smem>>
    %100 = vector.broadcast %99 : f32 to vector<1x256xf32>
    %101 = arith.subf %98, %100 : vector<1x256xf32>
    %102 = arith.mulf %101, %101 : vector<1x256xf32>
    %103 = arith.addf %97, %102 : vector<1x256xf32>
    %104 = vector.extract_strided_slice %1 {offsets = [2, 0], sizes = [1, 256], strides = [1, 1]} : vector<4x256xf32> to vector<1x256xf32>
    %c3_32 = arith.constant 3 : index
    %c2_33 = arith.constant 2 : index
    %105 = memref.load %arg2[%c3_32, %c2_33] : memref<16x4xf32, #tpu.memory_space<smem>>
    %106 = vector.broadcast %105 : f32 to vector<1x256xf32>
    %107 = arith.subf %104, %106 : vector<1x256xf32>
    %108 = arith.mulf %107, %107 : vector<1x256xf32>
    %109 = arith.addf %103, %108 : vector<1x256xf32>
    %110 = vector.extract_strided_slice %1 {offsets = [3, 0], sizes = [1, 256], strides = [1, 1]} : vector<4x256xf32> to vector<1x256xf32>
    %c3_34 = arith.constant 3 : index
    %c3_35 = arith.constant 3 : index
    %111 = memref.load %arg2[%c3_34, %c3_35] : memref<16x4xf32, #tpu.memory_space<smem>>
    %112 = vector.broadcast %111 : f32 to vector<1x256xf32>
    %113 = arith.subf %110, %112 : vector<1x256xf32>
    %114 = arith.mulf %113, %113 : vector<1x256xf32>
    %115 = arith.addf %109, %114 : vector<1x256xf32>
    %116 = arith.cmpf olt, %115, %88 : vector<1x256xf32>
    %117 = arith.select %116, %115, %88 : vector<1x256xi1>, vector<1x256xf32>
    %c3_i32 = arith.constant 3 : i32
    %118 = vector.broadcast %c3_i32 : i32 to vector<1x256xi32>
    %119 = arith.select %116, %118, %90 : vector<1x256xi1>, vector<1x256xi32>
    %cst_36 = arith.constant 0.000000e+00 : f32
    %120 = vector.broadcast %cst_36 : f32 to vector<1x256xf32>
    %121 = vector.extract_strided_slice %1 {offsets = [0, 0], sizes = [1, 256], strides = [1, 1]} : vector<4x256xf32> to vector<1x256xf32>
    %c4 = arith.constant 4 : index
    %c0_37 = arith.constant 0 : index
    %122 = memref.load %arg2[%c4, %c0_37] : memref<16x4xf32, #tpu.memory_space<smem>>
    %123 = vector.broadcast %122 : f32 to vector<1x256xf32>
    %124 = arith.subf %121, %123 : vector<1x256xf32>
    %125 = arith.mulf %124, %124 : vector<1x256xf32>
    %126 = arith.addf %120, %125 : vector<1x256xf32>
    %127 = vector.extract_strided_slice %1 {offsets = [1, 0], sizes = [1, 256], strides = [1, 1]} : vector<4x256xf32> to vector<1x256xf32>
    %c4_38 = arith.constant 4 : index
    %c1_39 = arith.constant 1 : index
    %128 = memref.load %arg2[%c4_38, %c1_39] : memref<16x4xf32, #tpu.memory_space<smem>>
    %129 = vector.broadcast %128 : f32 to vector<1x256xf32>
    %130 = arith.subf %127, %129 : vector<1x256xf32>
    %131 = arith.mulf %130, %130 : vector<1x256xf32>
    %132 = arith.addf %126, %131 : vector<1x256xf32>
    %133 = vector.extract_strided_slice %1 {offsets = [2, 0], sizes = [1, 256], strides = [1, 1]} : vector<4x256xf32> to vector<1x256xf32>
    %c4_40 = arith.constant 4 : index
    %c2_41 = arith.constant 2 : index
    %134 = memref.load %arg2[%c4_40, %c2_41] : memref<16x4xf32, #tpu.memory_space<smem>>
    %135 = vector.broadcast %134 : f32 to vector<1x256xf32>
    %136 = arith.subf %133, %135 : vector<1x256xf32>
    %137 = arith.mulf %136, %136 : vector<1x256xf32>
    %138 = arith.addf %132, %137 : vector<1x256xf32>
    %139 = vector.extract_strided_slice %1 {offsets = [3, 0], sizes = [1, 256], strides = [1, 1]} : vector<4x256xf32> to vector<1x256xf32>
    %c4_42 = arith.constant 4 : index
    %c3_43 = arith.constant 3 : index
    %140 = memref.load %arg2[%c4_42, %c3_43] : memref<16x4xf32, #tpu.memory_space<smem>>
    %141 = vector.broadcast %140 : f32 to vector<1x256xf32>
    %142 = arith.subf %139, %141 : vector<1x256xf32>
    %143 = arith.mulf %142, %142 : vector<1x256xf32>
    %144 = arith.addf %138, %143 : vector<1x256xf32>
    %145 = arith.cmpf olt, %144, %117 : vector<1x256xf32>
    %146 = arith.select %145, %144, %117 : vector<1x256xi1>, vector<1x256xf32>
    %c4_i32 = arith.constant 4 : i32
    %147 = vector.broadcast %c4_i32 : i32 to vector<1x256xi32>
    %148 = arith.select %145, %147, %119 : vector<1x256xi1>, vector<1x256xi32>
    %cst_44 = arith.constant 0.000000e+00 : f32
    %149 = vector.broadcast %cst_44 : f32 to vector<1x256xf32>
    %150 = vector.extract_strided_slice %1 {offsets = [0, 0], sizes = [1, 256], strides = [1, 1]} : vector<4x256xf32> to vector<1x256xf32>
    %c5 = arith.constant 5 : index
    %c0_45 = arith.constant 0 : index
    %151 = memref.load %arg2[%c5, %c0_45] : memref<16x4xf32, #tpu.memory_space<smem>>
    %152 = vector.broadcast %151 : f32 to vector<1x256xf32>
    %153 = arith.subf %150, %152 : vector<1x256xf32>
    %154 = arith.mulf %153, %153 : vector<1x256xf32>
    %155 = arith.addf %149, %154 : vector<1x256xf32>
    %156 = vector.extract_strided_slice %1 {offsets = [1, 0], sizes = [1, 256], strides = [1, 1]} : vector<4x256xf32> to vector<1x256xf32>
    %c5_46 = arith.constant 5 : index
    %c1_47 = arith.constant 1 : index
    %157 = memref.load %arg2[%c5_46, %c1_47] : memref<16x4xf32, #tpu.memory_space<smem>>
    %158 = vector.broadcast %157 : f32 to vector<1x256xf32>
    %159 = arith.subf %156, %158 : vector<1x256xf32>
    %160 = arith.mulf %159, %159 : vector<1x256xf32>
    %161 = arith.addf %155, %160 : vector<1x256xf32>
    %162 = vector.extract_strided_slice %1 {offsets = [2, 0], sizes = [1, 256], strides = [1, 1]} : vector<4x256xf32> to vector<1x256xf32>
    %c5_48 = arith.constant 5 : index
    %c2_49 = arith.constant 2 : index
    %163 = memref.load %arg2[%c5_48, %c2_49] : memref<16x4xf32, #tpu.memory_space<smem>>
    %164 = vector.broadcast %163 : f32 to vector<1x256xf32>
    %165 = arith.subf %162, %164 : vector<1x256xf32>
    %166 = arith.mulf %165, %165 : vector<1x256xf32>
    %167 = arith.addf %161, %166 : vector<1x256xf32>
    %168 = vector.extract_strided_slice %1 {offsets = [3, 0], sizes = [1, 256], strides = [1, 1]} : vector<4x256xf32> to vector<1x256xf32>
    %c5_50 = arith.constant 5 : index
    %c3_51 = arith.constant 3 : index
    %169 = memref.load %arg2[%c5_50, %c3_51] : memref<16x4xf32, #tpu.memory_space<smem>>
    %170 = vector.broadcast %169 : f32 to vector<1x256xf32>
    %171 = arith.subf %168, %170 : vector<1x256xf32>
    %172 = arith.mulf %171, %171 : vector<1x256xf32>
    %173 = arith.addf %167, %172 : vector<1x256xf32>
    %174 = arith.cmpf olt, %173, %146 : vector<1x256xf32>
    %175 = arith.select %174, %173, %146 : vector<1x256xi1>, vector<1x256xf32>
    %c5_i32 = arith.constant 5 : i32
    %176 = vector.broadcast %c5_i32 : i32 to vector<1x256xi32>
    %177 = arith.select %174, %176, %148 : vector<1x256xi1>, vector<1x256xi32>
    %cst_52 = arith.constant 0.000000e+00 : f32
    %178 = vector.broadcast %cst_52 : f32 to vector<1x256xf32>
    %179 = vector.extract_strided_slice %1 {offsets = [0, 0], sizes = [1, 256], strides = [1, 1]} : vector<4x256xf32> to vector<1x256xf32>
    %c6 = arith.constant 6 : index
    %c0_53 = arith.constant 0 : index
    %180 = memref.load %arg2[%c6, %c0_53] : memref<16x4xf32, #tpu.memory_space<smem>>
    %181 = vector.broadcast %180 : f32 to vector<1x256xf32>
    %182 = arith.subf %179, %181 : vector<1x256xf32>
    %183 = arith.mulf %182, %182 : vector<1x256xf32>
    %184 = arith.addf %178, %183 : vector<1x256xf32>
    %185 = vector.extract_strided_slice %1 {offsets = [1, 0], sizes = [1, 256], strides = [1, 1]} : vector<4x256xf32> to vector<1x256xf32>
    %c6_54 = arith.constant 6 : index
    %c1_55 = arith.constant 1 : index
    %186 = memref.load %arg2[%c6_54, %c1_55] : memref<16x4xf32, #tpu.memory_space<smem>>
    %187 = vector.broadcast %186 : f32 to vector<1x256xf32>
    %188 = arith.subf %185, %187 : vector<1x256xf32>
    %189 = arith.mulf %188, %188 : vector<1x256xf32>
    %190 = arith.addf %184, %189 : vector<1x256xf32>
    %191 = vector.extract_strided_slice %1 {offsets = [2, 0], sizes = [1, 256], strides = [1, 1]} : vector<4x256xf32> to vector<1x256xf32>
    %c6_56 = arith.constant 6 : index
    %c2_57 = arith.constant 2 : index
    %192 = memref.load %arg2[%c6_56, %c2_57] : memref<16x4xf32, #tpu.memory_space<smem>>
    %193 = vector.broadcast %192 : f32 to vector<1x256xf32>
    %194 = arith.subf %191, %193 : vector<1x256xf32>
    %195 = arith.mulf %194, %194 : vector<1x256xf32>
    %196 = arith.addf %190, %195 : vector<1x256xf32>
    %197 = vector.extract_strided_slice %1 {offsets = [3, 0], sizes = [1, 256], strides = [1, 1]} : vector<4x256xf32> to vector<1x256xf32>
    %c6_58 = arith.constant 6 : index
    %c3_59 = arith.constant 3 : index
    %198 = memref.load %arg2[%c6_58, %c3_59] : memref<16x4xf32, #tpu.memory_space<smem>>
    %199 = vector.broadcast %198 : f32 to vector<1x256xf32>
    %200 = arith.subf %197, %199 : vector<1x256xf32>
    %201 = arith.mulf %200, %200 : vector<1x256xf32>
    %202 = arith.addf %196, %201 : vector<1x256xf32>
    %203 = arith.cmpf olt, %202, %175 : vector<1x256xf32>
    %204 = arith.select %203, %202, %175 : vector<1x256xi1>, vector<1x256xf32>
    %c6_i32 = arith.constant 6 : i32
    %205 = vector.broadcast %c6_i32 : i32 to vector<1x256xi32>
    %206 = arith.select %203, %205, %177 : vector<1x256xi1>, vector<1x256xi32>
    %cst_60 = arith.constant 0.000000e+00 : f32
    %207 = vector.broadcast %cst_60 : f32 to vector<1x256xf32>
    %208 = vector.extract_strided_slice %1 {offsets = [0, 0], sizes = [1, 256], strides = [1, 1]} : vector<4x256xf32> to vector<1x256xf32>
    %c7 = arith.constant 7 : index
    %c0_61 = arith.constant 0 : index
    %209 = memref.load %arg2[%c7, %c0_61] : memref<16x4xf32, #tpu.memory_space<smem>>
    %210 = vector.broadcast %209 : f32 to vector<1x256xf32>
    %211 = arith.subf %208, %210 : vector<1x256xf32>
    %212 = arith.mulf %211, %211 : vector<1x256xf32>
    %213 = arith.addf %207, %212 : vector<1x256xf32>
    %214 = vector.extract_strided_slice %1 {offsets = [1, 0], sizes = [1, 256], strides = [1, 1]} : vector<4x256xf32> to vector<1x256xf32>
    %c7_62 = arith.constant 7 : index
    %c1_63 = arith.constant 1 : index
    %215 = memref.load %arg2[%c7_62, %c1_63] : memref<16x4xf32, #tpu.memory_space<smem>>
    %216 = vector.broadcast %215 : f32 to vector<1x256xf32>
    %217 = arith.subf %214, %216 : vector<1x256xf32>
    %218 = arith.mulf %217, %217 : vector<1x256xf32>
    %219 = arith.addf %213, %218 : vector<1x256xf32>
    %220 = vector.extract_strided_slice %1 {offsets = [2, 0], sizes = [1, 256], strides = [1, 1]} : vector<4x256xf32> to vector<1x256xf32>
    %c7_64 = arith.constant 7 : index
    %c2_65 = arith.constant 2 : index
    %221 = memref.load %arg2[%c7_64, %c2_65] : memref<16x4xf32, #tpu.memory_space<smem>>
    %222 = vector.broadcast %221 : f32 to vector<1x256xf32>
    %223 = arith.subf %220, %222 : vector<1x256xf32>
    %224 = arith.mulf %223, %223 : vector<1x256xf32>
    %225 = arith.addf %219, %224 : vector<1x256xf32>
    %226 = vector.extract_strided_slice %1 {offsets = [3, 0], sizes = [1, 256], strides = [1, 1]} : vector<4x256xf32> to vector<1x256xf32>
    %c7_66 = arith.constant 7 : index
    %c3_67 = arith.constant 3 : index
    %227 = memref.load %arg2[%c7_66, %c3_67] : memref<16x4xf32, #tpu.memory_space<smem>>
    %228 = vector.broadcast %227 : f32 to vector<1x256xf32>
    %229 = arith.subf %226, %228 : vector<1x256xf32>
    %230 = arith.mulf %229, %229 : vector<1x256xf32>
    %231 = arith.addf %225, %230 : vector<1x256xf32>
    %232 = arith.cmpf olt, %231, %204 : vector<1x256xf32>
    %233 = arith.select %232, %231, %204 : vector<1x256xi1>, vector<1x256xf32>
    %c7_i32 = arith.constant 7 : i32
    %234 = vector.broadcast %c7_i32 : i32 to vector<1x256xi32>
    %235 = arith.select %232, %234, %206 : vector<1x256xi1>, vector<1x256xi32>
    %cst_68 = arith.constant 0.000000e+00 : f32
    %236 = vector.broadcast %cst_68 : f32 to vector<1x256xf32>
    %237 = vector.extract_strided_slice %1 {offsets = [0, 0], sizes = [1, 256], strides = [1, 1]} : vector<4x256xf32> to vector<1x256xf32>
    %c8 = arith.constant 8 : index
    %c0_69 = arith.constant 0 : index
    %238 = memref.load %arg2[%c8, %c0_69] : memref<16x4xf32, #tpu.memory_space<smem>>
    %239 = vector.broadcast %238 : f32 to vector<1x256xf32>
    %240 = arith.subf %237, %239 : vector<1x256xf32>
    %241 = arith.mulf %240, %240 : vector<1x256xf32>
    %242 = arith.addf %236, %241 : vector<1x256xf32>
    %243 = vector.extract_strided_slice %1 {offsets = [1, 0], sizes = [1, 256], strides = [1, 1]} : vector<4x256xf32> to vector<1x256xf32>
    %c8_70 = arith.constant 8 : index
    %c1_71 = arith.constant 1 : index
    %244 = memref.load %arg2[%c8_70, %c1_71] : memref<16x4xf32, #tpu.memory_space<smem>>
    %245 = vector.broadcast %244 : f32 to vector<1x256xf32>
    %246 = arith.subf %243, %245 : vector<1x256xf32>
    %247 = arith.mulf %246, %246 : vector<1x256xf32>
    %248 = arith.addf %242, %247 : vector<1x256xf32>
    %249 = vector.extract_strided_slice %1 {offsets = [2, 0], sizes = [1, 256], strides = [1, 1]} : vector<4x256xf32> to vector<1x256xf32>
    %c8_72 = arith.constant 8 : index
    %c2_73 = arith.constant 2 : index
    %250 = memref.load %arg2[%c8_72, %c2_73] : memref<16x4xf32, #tpu.memory_space<smem>>
    %251 = vector.broadcast %250 : f32 to vector<1x256xf32>
    %252 = arith.subf %249, %251 : vector<1x256xf32>
    %253 = arith.mulf %252, %252 : vector<1x256xf32>
    %254 = arith.addf %248, %253 : vector<1x256xf32>
    %255 = vector.extract_strided_slice %1 {offsets = [3, 0], sizes = [1, 256], strides = [1, 1]} : vector<4x256xf32> to vector<1x256xf32>
    %c8_74 = arith.constant 8 : index
    %c3_75 = arith.constant 3 : index
    %256 = memref.load %arg2[%c8_74, %c3_75] : memref<16x4xf32, #tpu.memory_space<smem>>
    %257 = vector.broadcast %256 : f32 to vector<1x256xf32>
    %258 = arith.subf %255, %257 : vector<1x256xf32>
    %259 = arith.mulf %258, %258 : vector<1x256xf32>
    %260 = arith.addf %254, %259 : vector<1x256xf32>
    %261 = arith.cmpf olt, %260, %233 : vector<1x256xf32>
    %262 = arith.select %261, %260, %233 : vector<1x256xi1>, vector<1x256xf32>
    %c8_i32 = arith.constant 8 : i32
    %263 = vector.broadcast %c8_i32 : i32 to vector<1x256xi32>
    %264 = arith.select %261, %263, %235 : vector<1x256xi1>, vector<1x256xi32>
    %cst_76 = arith.constant 0.000000e+00 : f32
    %265 = vector.broadcast %cst_76 : f32 to vector<1x256xf32>
    %266 = vector.extract_strided_slice %1 {offsets = [0, 0], sizes = [1, 256], strides = [1, 1]} : vector<4x256xf32> to vector<1x256xf32>
    %c9 = arith.constant 9 : index
    %c0_77 = arith.constant 0 : index
    %267 = memref.load %arg2[%c9, %c0_77] : memref<16x4xf32, #tpu.memory_space<smem>>
    %268 = vector.broadcast %267 : f32 to vector<1x256xf32>
    %269 = arith.subf %266, %268 : vector<1x256xf32>
    %270 = arith.mulf %269, %269 : vector<1x256xf32>
    %271 = arith.addf %265, %270 : vector<1x256xf32>
    %272 = vector.extract_strided_slice %1 {offsets = [1, 0], sizes = [1, 256], strides = [1, 1]} : vector<4x256xf32> to vector<1x256xf32>
    %c9_78 = arith.constant 9 : index
    %c1_79 = arith.constant 1 : index
    %273 = memref.load %arg2[%c9_78, %c1_79] : memref<16x4xf32, #tpu.memory_space<smem>>
    %274 = vector.broadcast %273 : f32 to vector<1x256xf32>
    %275 = arith.subf %272, %274 : vector<1x256xf32>
    %276 = arith.mulf %275, %275 : vector<1x256xf32>
    %277 = arith.addf %271, %276 : vector<1x256xf32>
    %278 = vector.extract_strided_slice %1 {offsets = [2, 0], sizes = [1, 256], strides = [1, 1]} : vector<4x256xf32> to vector<1x256xf32>
    %c9_80 = arith.constant 9 : index
    %c2_81 = arith.constant 2 : index
    %279 = memref.load %arg2[%c9_80, %c2_81] : memref<16x4xf32, #tpu.memory_space<smem>>
    %280 = vector.broadcast %279 : f32 to vector<1x256xf32>
    %281 = arith.subf %278, %280 : vector<1x256xf32>
    %282 = arith.mulf %281, %281 : vector<1x256xf32>
    %283 = arith.addf %277, %282 : vector<1x256xf32>
    %284 = vector.extract_strided_slice %1 {offsets = [3, 0], sizes = [1, 256], strides = [1, 1]} : vector<4x256xf32> to vector<1x256xf32>
    %c9_82 = arith.constant 9 : index
    %c3_83 = arith.constant 3 : index
    %285 = memref.load %arg2[%c9_82, %c3_83] : memref<16x4xf32, #tpu.memory_space<smem>>
    %286 = vector.broadcast %285 : f32 to vector<1x256xf32>
    %287 = arith.subf %284, %286 : vector<1x256xf32>
    %288 = arith.mulf %287, %287 : vector<1x256xf32>
    %289 = arith.addf %283, %288 : vector<1x256xf32>
    %290 = arith.cmpf olt, %289, %262 : vector<1x256xf32>
    %291 = arith.select %290, %289, %262 : vector<1x256xi1>, vector<1x256xf32>
    %c9_i32 = arith.constant 9 : i32
    %292 = vector.broadcast %c9_i32 : i32 to vector<1x256xi32>
    %293 = arith.select %290, %292, %264 : vector<1x256xi1>, vector<1x256xi32>
    %cst_84 = arith.constant 0.000000e+00 : f32
    %294 = vector.broadcast %cst_84 : f32 to vector<1x256xf32>
    %295 = vector.extract_strided_slice %1 {offsets = [0, 0], sizes = [1, 256], strides = [1, 1]} : vector<4x256xf32> to vector<1x256xf32>
    %c10 = arith.constant 10 : index
    %c0_85 = arith.constant 0 : index
    %296 = memref.load %arg2[%c10, %c0_85] : memref<16x4xf32, #tpu.memory_space<smem>>
    %297 = vector.broadcast %296 : f32 to vector<1x256xf32>
    %298 = arith.subf %295, %297 : vector<1x256xf32>
    %299 = arith.mulf %298, %298 : vector<1x256xf32>
    %300 = arith.addf %294, %299 : vector<1x256xf32>
    %301 = vector.extract_strided_slice %1 {offsets = [1, 0], sizes = [1, 256], strides = [1, 1]} : vector<4x256xf32> to vector<1x256xf32>
    %c10_86 = arith.constant 10 : index
    %c1_87 = arith.constant 1 : index
    %302 = memref.load %arg2[%c10_86, %c1_87] : memref<16x4xf32, #tpu.memory_space<smem>>
    %303 = vector.broadcast %302 : f32 to vector<1x256xf32>
    %304 = arith.subf %301, %303 : vector<1x256xf32>
    %305 = arith.mulf %304, %304 : vector<1x256xf32>
    %306 = arith.addf %300, %305 : vector<1x256xf32>
    %307 = vector.extract_strided_slice %1 {offsets = [2, 0], sizes = [1, 256], strides = [1, 1]} : vector<4x256xf32> to vector<1x256xf32>
    %c10_88 = arith.constant 10 : index
    %c2_89 = arith.constant 2 : index
    %308 = memref.load %arg2[%c10_88, %c2_89] : memref<16x4xf32, #tpu.memory_space<smem>>
    %309 = vector.broadcast %308 : f32 to vector<1x256xf32>
    %310 = arith.subf %307, %309 : vector<1x256xf32>
    %311 = arith.mulf %310, %310 : vector<1x256xf32>
    %312 = arith.addf %306, %311 : vector<1x256xf32>
    %313 = vector.extract_strided_slice %1 {offsets = [3, 0], sizes = [1, 256], strides = [1, 1]} : vector<4x256xf32> to vector<1x256xf32>
    %c10_90 = arith.constant 10 : index
    %c3_91 = arith.constant 3 : index
    %314 = memref.load %arg2[%c10_90, %c3_91] : memref<16x4xf32, #tpu.memory_space<smem>>
    %315 = vector.broadcast %314 : f32 to vector<1x256xf32>
    %316 = arith.subf %313, %315 : vector<1x256xf32>
    %317 = arith.mulf %316, %316 : vector<1x256xf32>
    %318 = arith.addf %312, %317 : vector<1x256xf32>
    %319 = arith.cmpf olt, %318, %291 : vector<1x256xf32>
    %320 = arith.select %319, %318, %291 : vector<1x256xi1>, vector<1x256xf32>
    %c10_i32 = arith.constant 10 : i32
    %321 = vector.broadcast %c10_i32 : i32 to vector<1x256xi32>
    %322 = arith.select %319, %321, %293 : vector<1x256xi1>, vector<1x256xi32>
    %cst_92 = arith.constant 0.000000e+00 : f32
    %323 = vector.broadcast %cst_92 : f32 to vector<1x256xf32>
    %324 = vector.extract_strided_slice %1 {offsets = [0, 0], sizes = [1, 256], strides = [1, 1]} : vector<4x256xf32> to vector<1x256xf32>
    %c11 = arith.constant 11 : index
    %c0_93 = arith.constant 0 : index
    %325 = memref.load %arg2[%c11, %c0_93] : memref<16x4xf32, #tpu.memory_space<smem>>
    %326 = vector.broadcast %325 : f32 to vector<1x256xf32>
    %327 = arith.subf %324, %326 : vector<1x256xf32>
    %328 = arith.mulf %327, %327 : vector<1x256xf32>
    %329 = arith.addf %323, %328 : vector<1x256xf32>
    %330 = vector.extract_strided_slice %1 {offsets = [1, 0], sizes = [1, 256], strides = [1, 1]} : vector<4x256xf32> to vector<1x256xf32>
    %c11_94 = arith.constant 11 : index
    %c1_95 = arith.constant 1 : index
    %331 = memref.load %arg2[%c11_94, %c1_95] : memref<16x4xf32, #tpu.memory_space<smem>>
    %332 = vector.broadcast %331 : f32 to vector<1x256xf32>
    %333 = arith.subf %330, %332 : vector<1x256xf32>
    %334 = arith.mulf %333, %333 : vector<1x256xf32>
    %335 = arith.addf %329, %334 : vector<1x256xf32>
    %336 = vector.extract_strided_slice %1 {offsets = [2, 0], sizes = [1, 256], strides = [1, 1]} : vector<4x256xf32> to vector<1x256xf32>
    %c11_96 = arith.constant 11 : index
    %c2_97 = arith.constant 2 : index
    %337 = memref.load %arg2[%c11_96, %c2_97] : memref<16x4xf32, #tpu.memory_space<smem>>
    %338 = vector.broadcast %337 : f32 to vector<1x256xf32>
    %339 = arith.subf %336, %338 : vector<1x256xf32>
    %340 = arith.mulf %339, %339 : vector<1x256xf32>
    %341 = arith.addf %335, %340 : vector<1x256xf32>
    %342 = vector.extract_strided_slice %1 {offsets = [3, 0], sizes = [1, 256], strides = [1, 1]} : vector<4x256xf32> to vector<1x256xf32>
    %c11_98 = arith.constant 11 : index
    %c3_99 = arith.constant 3 : index
    %343 = memref.load %arg2[%c11_98, %c3_99] : memref<16x4xf32, #tpu.memory_space<smem>>
    %344 = vector.broadcast %343 : f32 to vector<1x256xf32>
    %345 = arith.subf %342, %344 : vector<1x256xf32>
    %346 = arith.mulf %345, %345 : vector<1x256xf32>
    %347 = arith.addf %341, %346 : vector<1x256xf32>
    %348 = arith.cmpf olt, %347, %320 : vector<1x256xf32>
    %349 = arith.select %348, %347, %320 : vector<1x256xi1>, vector<1x256xf32>
    %c11_i32 = arith.constant 11 : i32
    %350 = vector.broadcast %c11_i32 : i32 to vector<1x256xi32>
    %351 = arith.select %348, %350, %322 : vector<1x256xi1>, vector<1x256xi32>
    %cst_100 = arith.constant 0.000000e+00 : f32
    %352 = vector.broadcast %cst_100 : f32 to vector<1x256xf32>
    %353 = vector.extract_strided_slice %1 {offsets = [0, 0], sizes = [1, 256], strides = [1, 1]} : vector<4x256xf32> to vector<1x256xf32>
    %c12 = arith.constant 12 : index
    %c0_101 = arith.constant 0 : index
    %354 = memref.load %arg2[%c12, %c0_101] : memref<16x4xf32, #tpu.memory_space<smem>>
    %355 = vector.broadcast %354 : f32 to vector<1x256xf32>
    %356 = arith.subf %353, %355 : vector<1x256xf32>
    %357 = arith.mulf %356, %356 : vector<1x256xf32>
    %358 = arith.addf %352, %357 : vector<1x256xf32>
    %359 = vector.extract_strided_slice %1 {offsets = [1, 0], sizes = [1, 256], strides = [1, 1]} : vector<4x256xf32> to vector<1x256xf32>
    %c12_102 = arith.constant 12 : index
    %c1_103 = arith.constant 1 : index
    %360 = memref.load %arg2[%c12_102, %c1_103] : memref<16x4xf32, #tpu.memory_space<smem>>
    %361 = vector.broadcast %360 : f32 to vector<1x256xf32>
    %362 = arith.subf %359, %361 : vector<1x256xf32>
    %363 = arith.mulf %362, %362 : vector<1x256xf32>
    %364 = arith.addf %358, %363 : vector<1x256xf32>
    %365 = vector.extract_strided_slice %1 {offsets = [2, 0], sizes = [1, 256], strides = [1, 1]} : vector<4x256xf32> to vector<1x256xf32>
    %c12_104 = arith.constant 12 : index
    %c2_105 = arith.constant 2 : index
    %366 = memref.load %arg2[%c12_104, %c2_105] : memref<16x4xf32, #tpu.memory_space<smem>>
    %367 = vector.broadcast %366 : f32 to vector<1x256xf32>
    %368 = arith.subf %365, %367 : vector<1x256xf32>
    %369 = arith.mulf %368, %368 : vector<1x256xf32>
    %370 = arith.addf %364, %369 : vector<1x256xf32>
    %371 = vector.extract_strided_slice %1 {offsets = [3, 0], sizes = [1, 256], strides = [1, 1]} : vector<4x256xf32> to vector<1x256xf32>
    %c12_106 = arith.constant 12 : index
    %c3_107 = arith.constant 3 : index
    %372 = memref.load %arg2[%c12_106, %c3_107] : memref<16x4xf32, #tpu.memory_space<smem>>
    %373 = vector.broadcast %372 : f32 to vector<1x256xf32>
    %374 = arith.subf %371, %373 : vector<1x256xf32>
    %375 = arith.mulf %374, %374 : vector<1x256xf32>
    %376 = arith.addf %370, %375 : vector<1x256xf32>
    %377 = arith.cmpf olt, %376, %349 : vector<1x256xf32>
    %378 = arith.select %377, %376, %349 : vector<1x256xi1>, vector<1x256xf32>
    %c12_i32 = arith.constant 12 : i32
    %379 = vector.broadcast %c12_i32 : i32 to vector<1x256xi32>
    %380 = arith.select %377, %379, %351 : vector<1x256xi1>, vector<1x256xi32>
    %cst_108 = arith.constant 0.000000e+00 : f32
    %381 = vector.broadcast %cst_108 : f32 to vector<1x256xf32>
    %382 = vector.extract_strided_slice %1 {offsets = [0, 0], sizes = [1, 256], strides = [1, 1]} : vector<4x256xf32> to vector<1x256xf32>
    %c13 = arith.constant 13 : index
    %c0_109 = arith.constant 0 : index
    %383 = memref.load %arg2[%c13, %c0_109] : memref<16x4xf32, #tpu.memory_space<smem>>
    %384 = vector.broadcast %383 : f32 to vector<1x256xf32>
    %385 = arith.subf %382, %384 : vector<1x256xf32>
    %386 = arith.mulf %385, %385 : vector<1x256xf32>
    %387 = arith.addf %381, %386 : vector<1x256xf32>
    %388 = vector.extract_strided_slice %1 {offsets = [1, 0], sizes = [1, 256], strides = [1, 1]} : vector<4x256xf32> to vector<1x256xf32>
    %c13_110 = arith.constant 13 : index
    %c1_111 = arith.constant 1 : index
    %389 = memref.load %arg2[%c13_110, %c1_111] : memref<16x4xf32, #tpu.memory_space<smem>>
    %390 = vector.broadcast %389 : f32 to vector<1x256xf32>
    %391 = arith.subf %388, %390 : vector<1x256xf32>
    %392 = arith.mulf %391, %391 : vector<1x256xf32>
    %393 = arith.addf %387, %392 : vector<1x256xf32>
    %394 = vector.extract_strided_slice %1 {offsets = [2, 0], sizes = [1, 256], strides = [1, 1]} : vector<4x256xf32> to vector<1x256xf32>
    %c13_112 = arith.constant 13 : index
    %c2_113 = arith.constant 2 : index
    %395 = memref.load %arg2[%c13_112, %c2_113] : memref<16x4xf32, #tpu.memory_space<smem>>
    %396 = vector.broadcast %395 : f32 to vector<1x256xf32>
    %397 = arith.subf %394, %396 : vector<1x256xf32>
    %398 = arith.mulf %397, %397 : vector<1x256xf32>
    %399 = arith.addf %393, %398 : vector<1x256xf32>
    %400 = vector.extract_strided_slice %1 {offsets = [3, 0], sizes = [1, 256], strides = [1, 1]} : vector<4x256xf32> to vector<1x256xf32>
    %c13_114 = arith.constant 13 : index
    %c3_115 = arith.constant 3 : index
    %401 = memref.load %arg2[%c13_114, %c3_115] : memref<16x4xf32, #tpu.memory_space<smem>>
    %402 = vector.broadcast %401 : f32 to vector<1x256xf32>
    %403 = arith.subf %400, %402 : vector<1x256xf32>
    %404 = arith.mulf %403, %403 : vector<1x256xf32>
    %405 = arith.addf %399, %404 : vector<1x256xf32>
    %406 = arith.cmpf olt, %405, %378 : vector<1x256xf32>
    %407 = arith.select %406, %405, %378 : vector<1x256xi1>, vector<1x256xf32>
    %c13_i32 = arith.constant 13 : i32
    %408 = vector.broadcast %c13_i32 : i32 to vector<1x256xi32>
    %409 = arith.select %406, %408, %380 : vector<1x256xi1>, vector<1x256xi32>
    %cst_116 = arith.constant 0.000000e+00 : f32
    %410 = vector.broadcast %cst_116 : f32 to vector<1x256xf32>
    %411 = vector.extract_strided_slice %1 {offsets = [0, 0], sizes = [1, 256], strides = [1, 1]} : vector<4x256xf32> to vector<1x256xf32>
    %c14 = arith.constant 14 : index
    %c0_117 = arith.constant 0 : index
    %412 = memref.load %arg2[%c14, %c0_117] : memref<16x4xf32, #tpu.memory_space<smem>>
    %413 = vector.broadcast %412 : f32 to vector<1x256xf32>
    %414 = arith.subf %411, %413 : vector<1x256xf32>
    %415 = arith.mulf %414, %414 : vector<1x256xf32>
    %416 = arith.addf %410, %415 : vector<1x256xf32>
    %417 = vector.extract_strided_slice %1 {offsets = [1, 0], sizes = [1, 256], strides = [1, 1]} : vector<4x256xf32> to vector<1x256xf32>
    %c14_118 = arith.constant 14 : index
    %c1_119 = arith.constant 1 : index
    %418 = memref.load %arg2[%c14_118, %c1_119] : memref<16x4xf32, #tpu.memory_space<smem>>
    %419 = vector.broadcast %418 : f32 to vector<1x256xf32>
    %420 = arith.subf %417, %419 : vector<1x256xf32>
    %421 = arith.mulf %420, %420 : vector<1x256xf32>
    %422 = arith.addf %416, %421 : vector<1x256xf32>
    %423 = vector.extract_strided_slice %1 {offsets = [2, 0], sizes = [1, 256], strides = [1, 1]} : vector<4x256xf32> to vector<1x256xf32>
    %c14_120 = arith.constant 14 : index
    %c2_121 = arith.constant 2 : index
    %424 = memref.load %arg2[%c14_120, %c2_121] : memref<16x4xf32, #tpu.memory_space<smem>>
    %425 = vector.broadcast %424 : f32 to vector<1x256xf32>
    %426 = arith.subf %423, %425 : vector<1x256xf32>
    %427 = arith.mulf %426, %426 : vector<1x256xf32>
    %428 = arith.addf %422, %427 : vector<1x256xf32>
    %429 = vector.extract_strided_slice %1 {offsets = [3, 0], sizes = [1, 256], strides = [1, 1]} : vector<4x256xf32> to vector<1x256xf32>
    %c14_122 = arith.constant 14 : index
    %c3_123 = arith.constant 3 : index
    %430 = memref.load %arg2[%c14_122, %c3_123] : memref<16x4xf32, #tpu.memory_space<smem>>
    %431 = vector.broadcast %430 : f32 to vector<1x256xf32>
    %432 = arith.subf %429, %431 : vector<1x256xf32>
    %433 = arith.mulf %432, %432 : vector<1x256xf32>
    %434 = arith.addf %428, %433 : vector<1x256xf32>
    %435 = arith.cmpf olt, %434, %407 : vector<1x256xf32>
    %436 = arith.select %435, %434, %407 : vector<1x256xi1>, vector<1x256xf32>
    %c14_i32 = arith.constant 14 : i32
    %437 = vector.broadcast %c14_i32 : i32 to vector<1x256xi32>
    %438 = arith.select %435, %437, %409 : vector<1x256xi1>, vector<1x256xi32>
    %cst_124 = arith.constant 0.000000e+00 : f32
    %439 = vector.broadcast %cst_124 : f32 to vector<1x256xf32>
    %440 = vector.extract_strided_slice %1 {offsets = [0, 0], sizes = [1, 256], strides = [1, 1]} : vector<4x256xf32> to vector<1x256xf32>
    %c15 = arith.constant 15 : index
    %c0_125 = arith.constant 0 : index
    %441 = memref.load %arg2[%c15, %c0_125] : memref<16x4xf32, #tpu.memory_space<smem>>
    %442 = vector.broadcast %441 : f32 to vector<1x256xf32>
    %443 = arith.subf %440, %442 : vector<1x256xf32>
    %444 = arith.mulf %443, %443 : vector<1x256xf32>
    %445 = arith.addf %439, %444 : vector<1x256xf32>
    %446 = vector.extract_strided_slice %1 {offsets = [1, 0], sizes = [1, 256], strides = [1, 1]} : vector<4x256xf32> to vector<1x256xf32>
    %c15_126 = arith.constant 15 : index
    %c1_127 = arith.constant 1 : index
    %447 = memref.load %arg2[%c15_126, %c1_127] : memref<16x4xf32, #tpu.memory_space<smem>>
    %448 = vector.broadcast %447 : f32 to vector<1x256xf32>
    %449 = arith.subf %446, %448 : vector<1x256xf32>
    %450 = arith.mulf %449, %449 : vector<1x256xf32>
    %451 = arith.addf %445, %450 : vector<1x256xf32>
    %452 = vector.extract_strided_slice %1 {offsets = [2, 0], sizes = [1, 256], strides = [1, 1]} : vector<4x256xf32> to vector<1x256xf32>
    %c15_128 = arith.constant 15 : index
    %c2_129 = arith.constant 2 : index
    %453 = memref.load %arg2[%c15_128, %c2_129] : memref<16x4xf32, #tpu.memory_space<smem>>
    %454 = vector.broadcast %453 : f32 to vector<1x256xf32>
    %455 = arith.subf %452, %454 : vector<1x256xf32>
    %456 = arith.mulf %455, %455 : vector<1x256xf32>
    %457 = arith.addf %451, %456 : vector<1x256xf32>
    %458 = vector.extract_strided_slice %1 {offsets = [3, 0], sizes = [1, 256], strides = [1, 1]} : vector<4x256xf32> to vector<1x256xf32>
    %c15_130 = arith.constant 15 : index
    %c3_131 = arith.constant 3 : index
    %459 = memref.load %arg2[%c15_130, %c3_131] : memref<16x4xf32, #tpu.memory_space<smem>>
    %460 = vector.broadcast %459 : f32 to vector<1x256xf32>
    %461 = arith.subf %458, %460 : vector<1x256xf32>
    %462 = arith.mulf %461, %461 : vector<1x256xf32>
    %463 = arith.addf %457, %462 : vector<1x256xf32>
    %464 = arith.cmpf olt, %463, %436 : vector<1x256xf32>
    %465 = arith.select %464, %463, %436 : vector<1x256xi1>, vector<1x256xf32>
    %c15_i32 = arith.constant 15 : i32
    %466 = vector.broadcast %c15_i32 : i32 to vector<1x256xi32>
    %467 = arith.select %464, %466, %438 : vector<1x256xi1>, vector<1x256xi32>
    %cst_132 = arith.constant 0.000000e+00 : f32
    %468 = vector.broadcast %cst_132 : f32 to vector<1x256xf32>
    %c0_i32_133 = arith.constant 0 : i32
    %469 = vector.broadcast %c0_i32_133 : i32 to vector<1x256xi32>
    %470 = arith.cmpi eq, %467, %469 : vector<1x256xi32>
    %c0_134 = arith.constant 0 : index
    %c0_135 = arith.constant 0 : index
    %471 = memref.load %arg2[%c0_134, %c0_135] : memref<16x4xf32, #tpu.memory_space<smem>>
    %472 = vector.broadcast %471 : f32 to vector<1x256xf32>
    %473 = arith.select %470, %472, %468 : vector<1x256xi1>, vector<1x256xf32>
    %c1_i32_136 = arith.constant 1 : i32
    %474 = vector.broadcast %c1_i32_136 : i32 to vector<1x256xi32>
    %475 = arith.cmpi eq, %467, %474 : vector<1x256xi32>
    %c1_137 = arith.constant 1 : index
    %c0_138 = arith.constant 0 : index
    %476 = memref.load %arg2[%c1_137, %c0_138] : memref<16x4xf32, #tpu.memory_space<smem>>
    %477 = vector.broadcast %476 : f32 to vector<1x256xf32>
    %478 = arith.select %475, %477, %473 : vector<1x256xi1>, vector<1x256xf32>
    %c2_i32_139 = arith.constant 2 : i32
    %479 = vector.broadcast %c2_i32_139 : i32 to vector<1x256xi32>
    %480 = arith.cmpi eq, %467, %479 : vector<1x256xi32>
    %c2_140 = arith.constant 2 : index
    %c0_141 = arith.constant 0 : index
    %481 = memref.load %arg2[%c2_140, %c0_141] : memref<16x4xf32, #tpu.memory_space<smem>>
    %482 = vector.broadcast %481 : f32 to vector<1x256xf32>
    %483 = arith.select %480, %482, %478 : vector<1x256xi1>, vector<1x256xf32>
    %c3_i32_142 = arith.constant 3 : i32
    %484 = vector.broadcast %c3_i32_142 : i32 to vector<1x256xi32>
    %485 = arith.cmpi eq, %467, %484 : vector<1x256xi32>
    %c3_143 = arith.constant 3 : index
    %c0_144 = arith.constant 0 : index
    %486 = memref.load %arg2[%c3_143, %c0_144] : memref<16x4xf32, #tpu.memory_space<smem>>
    %487 = vector.broadcast %486 : f32 to vector<1x256xf32>
    %488 = arith.select %485, %487, %483 : vector<1x256xi1>, vector<1x256xf32>
    %c4_i32_145 = arith.constant 4 : i32
    %489 = vector.broadcast %c4_i32_145 : i32 to vector<1x256xi32>
    %490 = arith.cmpi eq, %467, %489 : vector<1x256xi32>
    %c4_146 = arith.constant 4 : index
    %c0_147 = arith.constant 0 : index
    %491 = memref.load %arg2[%c4_146, %c0_147] : memref<16x4xf32, #tpu.memory_space<smem>>
    %492 = vector.broadcast %491 : f32 to vector<1x256xf32>
    %493 = arith.select %490, %492, %488 : vector<1x256xi1>, vector<1x256xf32>
    %c5_i32_148 = arith.constant 5 : i32
    %494 = vector.broadcast %c5_i32_148 : i32 to vector<1x256xi32>
    %495 = arith.cmpi eq, %467, %494 : vector<1x256xi32>
    %c5_149 = arith.constant 5 : index
    %c0_150 = arith.constant 0 : index
    %496 = memref.load %arg2[%c5_149, %c0_150] : memref<16x4xf32, #tpu.memory_space<smem>>
    %497 = vector.broadcast %496 : f32 to vector<1x256xf32>
    %498 = arith.select %495, %497, %493 : vector<1x256xi1>, vector<1x256xf32>
    %c6_i32_151 = arith.constant 6 : i32
    %499 = vector.broadcast %c6_i32_151 : i32 to vector<1x256xi32>
    %500 = arith.cmpi eq, %467, %499 : vector<1x256xi32>
    %c6_152 = arith.constant 6 : index
    %c0_153 = arith.constant 0 : index
    %501 = memref.load %arg2[%c6_152, %c0_153] : memref<16x4xf32, #tpu.memory_space<smem>>
    %502 = vector.broadcast %501 : f32 to vector<1x256xf32>
    %503 = arith.select %500, %502, %498 : vector<1x256xi1>, vector<1x256xf32>
    %c7_i32_154 = arith.constant 7 : i32
    %504 = vector.broadcast %c7_i32_154 : i32 to vector<1x256xi32>
    %505 = arith.cmpi eq, %467, %504 : vector<1x256xi32>
    %c7_155 = arith.constant 7 : index
    %c0_156 = arith.constant 0 : index
    %506 = memref.load %arg2[%c7_155, %c0_156] : memref<16x4xf32, #tpu.memory_space<smem>>
    %507 = vector.broadcast %506 : f32 to vector<1x256xf32>
    %508 = arith.select %505, %507, %503 : vector<1x256xi1>, vector<1x256xf32>
    %c8_i32_157 = arith.constant 8 : i32
    %509 = vector.broadcast %c8_i32_157 : i32 to vector<1x256xi32>
    %510 = arith.cmpi eq, %467, %509 : vector<1x256xi32>
    %c8_158 = arith.constant 8 : index
    %c0_159 = arith.constant 0 : index
    %511 = memref.load %arg2[%c8_158, %c0_159] : memref<16x4xf32, #tpu.memory_space<smem>>
    %512 = vector.broadcast %511 : f32 to vector<1x256xf32>
    %513 = arith.select %510, %512, %508 : vector<1x256xi1>, vector<1x256xf32>
    %c9_i32_160 = arith.constant 9 : i32
    %514 = vector.broadcast %c9_i32_160 : i32 to vector<1x256xi32>
    %515 = arith.cmpi eq, %467, %514 : vector<1x256xi32>
    %c9_161 = arith.constant 9 : index
    %c0_162 = arith.constant 0 : index
    %516 = memref.load %arg2[%c9_161, %c0_162] : memref<16x4xf32, #tpu.memory_space<smem>>
    %517 = vector.broadcast %516 : f32 to vector<1x256xf32>
    %518 = arith.select %515, %517, %513 : vector<1x256xi1>, vector<1x256xf32>
    %c10_i32_163 = arith.constant 10 : i32
    %519 = vector.broadcast %c10_i32_163 : i32 to vector<1x256xi32>
    %520 = arith.cmpi eq, %467, %519 : vector<1x256xi32>
    %c10_164 = arith.constant 10 : index
    %c0_165 = arith.constant 0 : index
    %521 = memref.load %arg2[%c10_164, %c0_165] : memref<16x4xf32, #tpu.memory_space<smem>>
    %522 = vector.broadcast %521 : f32 to vector<1x256xf32>
    %523 = arith.select %520, %522, %518 : vector<1x256xi1>, vector<1x256xf32>
    %c11_i32_166 = arith.constant 11 : i32
    %524 = vector.broadcast %c11_i32_166 : i32 to vector<1x256xi32>
    %525 = arith.cmpi eq, %467, %524 : vector<1x256xi32>
    %c11_167 = arith.constant 11 : index
    %c0_168 = arith.constant 0 : index
    %526 = memref.load %arg2[%c11_167, %c0_168] : memref<16x4xf32, #tpu.memory_space<smem>>
    %527 = vector.broadcast %526 : f32 to vector<1x256xf32>
    %528 = arith.select %525, %527, %523 : vector<1x256xi1>, vector<1x256xf32>
    %c12_i32_169 = arith.constant 12 : i32
    %529 = vector.broadcast %c12_i32_169 : i32 to vector<1x256xi32>
    %530 = arith.cmpi eq, %467, %529 : vector<1x256xi32>
    %c12_170 = arith.constant 12 : index
    %c0_171 = arith.constant 0 : index
    %531 = memref.load %arg2[%c12_170, %c0_171] : memref<16x4xf32, #tpu.memory_space<smem>>
    %532 = vector.broadcast %531 : f32 to vector<1x256xf32>
    %533 = arith.select %530, %532, %528 : vector<1x256xi1>, vector<1x256xf32>
    %c13_i32_172 = arith.constant 13 : i32
    %534 = vector.broadcast %c13_i32_172 : i32 to vector<1x256xi32>
    %535 = arith.cmpi eq, %467, %534 : vector<1x256xi32>
    %c13_173 = arith.constant 13 : index
    %c0_174 = arith.constant 0 : index
    %536 = memref.load %arg2[%c13_173, %c0_174] : memref<16x4xf32, #tpu.memory_space<smem>>
    %537 = vector.broadcast %536 : f32 to vector<1x256xf32>
    %538 = arith.select %535, %537, %533 : vector<1x256xi1>, vector<1x256xf32>
    %c14_i32_175 = arith.constant 14 : i32
    %539 = vector.broadcast %c14_i32_175 : i32 to vector<1x256xi32>
    %540 = arith.cmpi eq, %467, %539 : vector<1x256xi32>
    %c14_176 = arith.constant 14 : index
    %c0_177 = arith.constant 0 : index
    %541 = memref.load %arg2[%c14_176, %c0_177] : memref<16x4xf32, #tpu.memory_space<smem>>
    %542 = vector.broadcast %541 : f32 to vector<1x256xf32>
    %543 = arith.select %540, %542, %538 : vector<1x256xi1>, vector<1x256xf32>
    %c15_i32_178 = arith.constant 15 : i32
    %544 = vector.broadcast %c15_i32_178 : i32 to vector<1x256xi32>
    %545 = arith.cmpi eq, %467, %544 : vector<1x256xi32>
    %c15_179 = arith.constant 15 : index
    %c0_180 = arith.constant 0 : index
    %546 = memref.load %arg2[%c15_179, %c0_180] : memref<16x4xf32, #tpu.memory_space<smem>>
    %547 = vector.broadcast %546 : f32 to vector<1x256xf32>
    %548 = arith.select %545, %547, %543 : vector<1x256xi1>, vector<1x256xf32>
    %cst_181 = arith.constant 0.000000e+00 : f32
    %549 = vector.broadcast %cst_181 : f32 to vector<1x256xf32>
    %c0_i32_182 = arith.constant 0 : i32
    %550 = vector.broadcast %c0_i32_182 : i32 to vector<1x256xi32>
    %551 = arith.cmpi eq, %467, %550 : vector<1x256xi32>
    %c0_183 = arith.constant 0 : index
    %c1_184 = arith.constant 1 : index
    %552 = memref.load %arg2[%c0_183, %c1_184] : memref<16x4xf32, #tpu.memory_space<smem>>
    %553 = vector.broadcast %552 : f32 to vector<1x256xf32>
    %554 = arith.select %551, %553, %549 : vector<1x256xi1>, vector<1x256xf32>
    %c1_i32_185 = arith.constant 1 : i32
    %555 = vector.broadcast %c1_i32_185 : i32 to vector<1x256xi32>
    %556 = arith.cmpi eq, %467, %555 : vector<1x256xi32>
    %c1_186 = arith.constant 1 : index
    %c1_187 = arith.constant 1 : index
    %557 = memref.load %arg2[%c1_186, %c1_187] : memref<16x4xf32, #tpu.memory_space<smem>>
    %558 = vector.broadcast %557 : f32 to vector<1x256xf32>
    %559 = arith.select %556, %558, %554 : vector<1x256xi1>, vector<1x256xf32>
    %c2_i32_188 = arith.constant 2 : i32
    %560 = vector.broadcast %c2_i32_188 : i32 to vector<1x256xi32>
    %561 = arith.cmpi eq, %467, %560 : vector<1x256xi32>
    %c2_189 = arith.constant 2 : index
    %c1_190 = arith.constant 1 : index
    %562 = memref.load %arg2[%c2_189, %c1_190] : memref<16x4xf32, #tpu.memory_space<smem>>
    %563 = vector.broadcast %562 : f32 to vector<1x256xf32>
    %564 = arith.select %561, %563, %559 : vector<1x256xi1>, vector<1x256xf32>
    %c3_i32_191 = arith.constant 3 : i32
    %565 = vector.broadcast %c3_i32_191 : i32 to vector<1x256xi32>
    %566 = arith.cmpi eq, %467, %565 : vector<1x256xi32>
    %c3_192 = arith.constant 3 : index
    %c1_193 = arith.constant 1 : index
    %567 = memref.load %arg2[%c3_192, %c1_193] : memref<16x4xf32, #tpu.memory_space<smem>>
    %568 = vector.broadcast %567 : f32 to vector<1x256xf32>
    %569 = arith.select %566, %568, %564 : vector<1x256xi1>, vector<1x256xf32>
    %c4_i32_194 = arith.constant 4 : i32
    %570 = vector.broadcast %c4_i32_194 : i32 to vector<1x256xi32>
    %571 = arith.cmpi eq, %467, %570 : vector<1x256xi32>
    %c4_195 = arith.constant 4 : index
    %c1_196 = arith.constant 1 : index
    %572 = memref.load %arg2[%c4_195, %c1_196] : memref<16x4xf32, #tpu.memory_space<smem>>
    %573 = vector.broadcast %572 : f32 to vector<1x256xf32>
    %574 = arith.select %571, %573, %569 : vector<1x256xi1>, vector<1x256xf32>
    %c5_i32_197 = arith.constant 5 : i32
    %575 = vector.broadcast %c5_i32_197 : i32 to vector<1x256xi32>
    %576 = arith.cmpi eq, %467, %575 : vector<1x256xi32>
    %c5_198 = arith.constant 5 : index
    %c1_199 = arith.constant 1 : index
    %577 = memref.load %arg2[%c5_198, %c1_199] : memref<16x4xf32, #tpu.memory_space<smem>>
    %578 = vector.broadcast %577 : f32 to vector<1x256xf32>
    %579 = arith.select %576, %578, %574 : vector<1x256xi1>, vector<1x256xf32>
    %c6_i32_200 = arith.constant 6 : i32
    %580 = vector.broadcast %c6_i32_200 : i32 to vector<1x256xi32>
    %581 = arith.cmpi eq, %467, %580 : vector<1x256xi32>
    %c6_201 = arith.constant 6 : index
    %c1_202 = arith.constant 1 : index
    %582 = memref.load %arg2[%c6_201, %c1_202] : memref<16x4xf32, #tpu.memory_space<smem>>
    %583 = vector.broadcast %582 : f32 to vector<1x256xf32>
    %584 = arith.select %581, %583, %579 : vector<1x256xi1>, vector<1x256xf32>
    %c7_i32_203 = arith.constant 7 : i32
    %585 = vector.broadcast %c7_i32_203 : i32 to vector<1x256xi32>
    %586 = arith.cmpi eq, %467, %585 : vector<1x256xi32>
    %c7_204 = arith.constant 7 : index
    %c1_205 = arith.constant 1 : index
    %587 = memref.load %arg2[%c7_204, %c1_205] : memref<16x4xf32, #tpu.memory_space<smem>>
    %588 = vector.broadcast %587 : f32 to vector<1x256xf32>
    %589 = arith.select %586, %588, %584 : vector<1x256xi1>, vector<1x256xf32>
    %c8_i32_206 = arith.constant 8 : i32
    %590 = vector.broadcast %c8_i32_206 : i32 to vector<1x256xi32>
    %591 = arith.cmpi eq, %467, %590 : vector<1x256xi32>
    %c8_207 = arith.constant 8 : index
    %c1_208 = arith.constant 1 : index
    %592 = memref.load %arg2[%c8_207, %c1_208] : memref<16x4xf32, #tpu.memory_space<smem>>
    %593 = vector.broadcast %592 : f32 to vector<1x256xf32>
    %594 = arith.select %591, %593, %589 : vector<1x256xi1>, vector<1x256xf32>
    %c9_i32_209 = arith.constant 9 : i32
    %595 = vector.broadcast %c9_i32_209 : i32 to vector<1x256xi32>
    %596 = arith.cmpi eq, %467, %595 : vector<1x256xi32>
    %c9_210 = arith.constant 9 : index
    %c1_211 = arith.constant 1 : index
    %597 = memref.load %arg2[%c9_210, %c1_211] : memref<16x4xf32, #tpu.memory_space<smem>>
    %598 = vector.broadcast %597 : f32 to vector<1x256xf32>
    %599 = arith.select %596, %598, %594 : vector<1x256xi1>, vector<1x256xf32>
    %c10_i32_212 = arith.constant 10 : i32
    %600 = vector.broadcast %c10_i32_212 : i32 to vector<1x256xi32>
    %601 = arith.cmpi eq, %467, %600 : vector<1x256xi32>
    %c10_213 = arith.constant 10 : index
    %c1_214 = arith.constant 1 : index
    %602 = memref.load %arg2[%c10_213, %c1_214] : memref<16x4xf32, #tpu.memory_space<smem>>
    %603 = vector.broadcast %602 : f32 to vector<1x256xf32>
    %604 = arith.select %601, %603, %599 : vector<1x256xi1>, vector<1x256xf32>
    %c11_i32_215 = arith.constant 11 : i32
    %605 = vector.broadcast %c11_i32_215 : i32 to vector<1x256xi32>
    %606 = arith.cmpi eq, %467, %605 : vector<1x256xi32>
    %c11_216 = arith.constant 11 : index
    %c1_217 = arith.constant 1 : index
    %607 = memref.load %arg2[%c11_216, %c1_217] : memref<16x4xf32, #tpu.memory_space<smem>>
    %608 = vector.broadcast %607 : f32 to vector<1x256xf32>
    %609 = arith.select %606, %608, %604 : vector<1x256xi1>, vector<1x256xf32>
    %c12_i32_218 = arith.constant 12 : i32
    %610 = vector.broadcast %c12_i32_218 : i32 to vector<1x256xi32>
    %611 = arith.cmpi eq, %467, %610 : vector<1x256xi32>
    %c12_219 = arith.constant 12 : index
    %c1_220 = arith.constant 1 : index
    %612 = memref.load %arg2[%c12_219, %c1_220] : memref<16x4xf32, #tpu.memory_space<smem>>
    %613 = vector.broadcast %612 : f32 to vector<1x256xf32>
    %614 = arith.select %611, %613, %609 : vector<1x256xi1>, vector<1x256xf32>
    %c13_i32_221 = arith.constant 13 : i32
    %615 = vector.broadcast %c13_i32_221 : i32 to vector<1x256xi32>
    %616 = arith.cmpi eq, %467, %615 : vector<1x256xi32>
    %c13_222 = arith.constant 13 : index
    %c1_223 = arith.constant 1 : index
    %617 = memref.load %arg2[%c13_222, %c1_223] : memref<16x4xf32, #tpu.memory_space<smem>>
    %618 = vector.broadcast %617 : f32 to vector<1x256xf32>
    %619 = arith.select %616, %618, %614 : vector<1x256xi1>, vector<1x256xf32>
    %c14_i32_224 = arith.constant 14 : i32
    %620 = vector.broadcast %c14_i32_224 : i32 to vector<1x256xi32>
    %621 = arith.cmpi eq, %467, %620 : vector<1x256xi32>
    %c14_225 = arith.constant 14 : index
    %c1_226 = arith.constant 1 : index
    %622 = memref.load %arg2[%c14_225, %c1_226] : memref<16x4xf32, #tpu.memory_space<smem>>
    %623 = vector.broadcast %622 : f32 to vector<1x256xf32>
    %624 = arith.select %621, %623, %619 : vector<1x256xi1>, vector<1x256xf32>
    %c15_i32_227 = arith.constant 15 : i32
    %625 = vector.broadcast %c15_i32_227 : i32 to vector<1x256xi32>
    %626 = arith.cmpi eq, %467, %625 : vector<1x256xi32>
    %c15_228 = arith.constant 15 : index
    %c1_229 = arith.constant 1 : index
    %627 = memref.load %arg2[%c15_228, %c1_229] : memref<16x4xf32, #tpu.memory_space<smem>>
    %628 = vector.broadcast %627 : f32 to vector<1x256xf32>
    %629 = arith.select %626, %628, %624 : vector<1x256xi1>, vector<1x256xf32>
    %cst_230 = arith.constant 0.000000e+00 : f32
    %630 = vector.broadcast %cst_230 : f32 to vector<1x256xf32>
    %c0_i32_231 = arith.constant 0 : i32
    %631 = vector.broadcast %c0_i32_231 : i32 to vector<1x256xi32>
    %632 = arith.cmpi eq, %467, %631 : vector<1x256xi32>
    %c0_232 = arith.constant 0 : index
    %c2_233 = arith.constant 2 : index
    %633 = memref.load %arg2[%c0_232, %c2_233] : memref<16x4xf32, #tpu.memory_space<smem>>
    %634 = vector.broadcast %633 : f32 to vector<1x256xf32>
    %635 = arith.select %632, %634, %630 : vector<1x256xi1>, vector<1x256xf32>
    %c1_i32_234 = arith.constant 1 : i32
    %636 = vector.broadcast %c1_i32_234 : i32 to vector<1x256xi32>
    %637 = arith.cmpi eq, %467, %636 : vector<1x256xi32>
    %c1_235 = arith.constant 1 : index
    %c2_236 = arith.constant 2 : index
    %638 = memref.load %arg2[%c1_235, %c2_236] : memref<16x4xf32, #tpu.memory_space<smem>>
    %639 = vector.broadcast %638 : f32 to vector<1x256xf32>
    %640 = arith.select %637, %639, %635 : vector<1x256xi1>, vector<1x256xf32>
    %c2_i32_237 = arith.constant 2 : i32
    %641 = vector.broadcast %c2_i32_237 : i32 to vector<1x256xi32>
    %642 = arith.cmpi eq, %467, %641 : vector<1x256xi32>
    %c2_238 = arith.constant 2 : index
    %c2_239 = arith.constant 2 : index
    %643 = memref.load %arg2[%c2_238, %c2_239] : memref<16x4xf32, #tpu.memory_space<smem>>
    %644 = vector.broadcast %643 : f32 to vector<1x256xf32>
    %645 = arith.select %642, %644, %640 : vector<1x256xi1>, vector<1x256xf32>
    %c3_i32_240 = arith.constant 3 : i32
    %646 = vector.broadcast %c3_i32_240 : i32 to vector<1x256xi32>
    %647 = arith.cmpi eq, %467, %646 : vector<1x256xi32>
    %c3_241 = arith.constant 3 : index
    %c2_242 = arith.constant 2 : index
    %648 = memref.load %arg2[%c3_241, %c2_242] : memref<16x4xf32, #tpu.memory_space<smem>>
    %649 = vector.broadcast %648 : f32 to vector<1x256xf32>
    %650 = arith.select %647, %649, %645 : vector<1x256xi1>, vector<1x256xf32>
    %c4_i32_243 = arith.constant 4 : i32
    %651 = vector.broadcast %c4_i32_243 : i32 to vector<1x256xi32>
    %652 = arith.cmpi eq, %467, %651 : vector<1x256xi32>
    %c4_244 = arith.constant 4 : index
    %c2_245 = arith.constant 2 : index
    %653 = memref.load %arg2[%c4_244, %c2_245] : memref<16x4xf32, #tpu.memory_space<smem>>
    %654 = vector.broadcast %653 : f32 to vector<1x256xf32>
    %655 = arith.select %652, %654, %650 : vector<1x256xi1>, vector<1x256xf32>
    %c5_i32_246 = arith.constant 5 : i32
    %656 = vector.broadcast %c5_i32_246 : i32 to vector<1x256xi32>
    %657 = arith.cmpi eq, %467, %656 : vector<1x256xi32>
    %c5_247 = arith.constant 5 : index
    %c2_248 = arith.constant 2 : index
    %658 = memref.load %arg2[%c5_247, %c2_248] : memref<16x4xf32, #tpu.memory_space<smem>>
    %659 = vector.broadcast %658 : f32 to vector<1x256xf32>
    %660 = arith.select %657, %659, %655 : vector<1x256xi1>, vector<1x256xf32>
    %c6_i32_249 = arith.constant 6 : i32
    %661 = vector.broadcast %c6_i32_249 : i32 to vector<1x256xi32>
    %662 = arith.cmpi eq, %467, %661 : vector<1x256xi32>
    %c6_250 = arith.constant 6 : index
    %c2_251 = arith.constant 2 : index
    %663 = memref.load %arg2[%c6_250, %c2_251] : memref<16x4xf32, #tpu.memory_space<smem>>
    %664 = vector.broadcast %663 : f32 to vector<1x256xf32>
    %665 = arith.select %662, %664, %660 : vector<1x256xi1>, vector<1x256xf32>
    %c7_i32_252 = arith.constant 7 : i32
    %666 = vector.broadcast %c7_i32_252 : i32 to vector<1x256xi32>
    %667 = arith.cmpi eq, %467, %666 : vector<1x256xi32>
    %c7_253 = arith.constant 7 : index
    %c2_254 = arith.constant 2 : index
    %668 = memref.load %arg2[%c7_253, %c2_254] : memref<16x4xf32, #tpu.memory_space<smem>>
    %669 = vector.broadcast %668 : f32 to vector<1x256xf32>
    %670 = arith.select %667, %669, %665 : vector<1x256xi1>, vector<1x256xf32>
    %c8_i32_255 = arith.constant 8 : i32
    %671 = vector.broadcast %c8_i32_255 : i32 to vector<1x256xi32>
    %672 = arith.cmpi eq, %467, %671 : vector<1x256xi32>
    %c8_256 = arith.constant 8 : index
    %c2_257 = arith.constant 2 : index
    %673 = memref.load %arg2[%c8_256, %c2_257] : memref<16x4xf32, #tpu.memory_space<smem>>
    %674 = vector.broadcast %673 : f32 to vector<1x256xf32>
    %675 = arith.select %672, %674, %670 : vector<1x256xi1>, vector<1x256xf32>
    %c9_i32_258 = arith.constant 9 : i32
    %676 = vector.broadcast %c9_i32_258 : i32 to vector<1x256xi32>
    %677 = arith.cmpi eq, %467, %676 : vector<1x256xi32>
    %c9_259 = arith.constant 9 : index
    %c2_260 = arith.constant 2 : index
    %678 = memref.load %arg2[%c9_259, %c2_260] : memref<16x4xf32, #tpu.memory_space<smem>>
    %679 = vector.broadcast %678 : f32 to vector<1x256xf32>
    %680 = arith.select %677, %679, %675 : vector<1x256xi1>, vector<1x256xf32>
    %c10_i32_261 = arith.constant 10 : i32
    %681 = vector.broadcast %c10_i32_261 : i32 to vector<1x256xi32>
    %682 = arith.cmpi eq, %467, %681 : vector<1x256xi32>
    %c10_262 = arith.constant 10 : index
    %c2_263 = arith.constant 2 : index
    %683 = memref.load %arg2[%c10_262, %c2_263] : memref<16x4xf32, #tpu.memory_space<smem>>
    %684 = vector.broadcast %683 : f32 to vector<1x256xf32>
    %685 = arith.select %682, %684, %680 : vector<1x256xi1>, vector<1x256xf32>
    %c11_i32_264 = arith.constant 11 : i32
    %686 = vector.broadcast %c11_i32_264 : i32 to vector<1x256xi32>
    %687 = arith.cmpi eq, %467, %686 : vector<1x256xi32>
    %c11_265 = arith.constant 11 : index
    %c2_266 = arith.constant 2 : index
    %688 = memref.load %arg2[%c11_265, %c2_266] : memref<16x4xf32, #tpu.memory_space<smem>>
    %689 = vector.broadcast %688 : f32 to vector<1x256xf32>
    %690 = arith.select %687, %689, %685 : vector<1x256xi1>, vector<1x256xf32>
    %c12_i32_267 = arith.constant 12 : i32
    %691 = vector.broadcast %c12_i32_267 : i32 to vector<1x256xi32>
    %692 = arith.cmpi eq, %467, %691 : vector<1x256xi32>
    %c12_268 = arith.constant 12 : index
    %c2_269 = arith.constant 2 : index
    %693 = memref.load %arg2[%c12_268, %c2_269] : memref<16x4xf32, #tpu.memory_space<smem>>
    %694 = vector.broadcast %693 : f32 to vector<1x256xf32>
    %695 = arith.select %692, %694, %690 : vector<1x256xi1>, vector<1x256xf32>
    %c13_i32_270 = arith.constant 13 : i32
    %696 = vector.broadcast %c13_i32_270 : i32 to vector<1x256xi32>
    %697 = arith.cmpi eq, %467, %696 : vector<1x256xi32>
    %c13_271 = arith.constant 13 : index
    %c2_272 = arith.constant 2 : index
    %698 = memref.load %arg2[%c13_271, %c2_272] : memref<16x4xf32, #tpu.memory_space<smem>>
    %699 = vector.broadcast %698 : f32 to vector<1x256xf32>
    %700 = arith.select %697, %699, %695 : vector<1x256xi1>, vector<1x256xf32>
    %c14_i32_273 = arith.constant 14 : i32
    %701 = vector.broadcast %c14_i32_273 : i32 to vector<1x256xi32>
    %702 = arith.cmpi eq, %467, %701 : vector<1x256xi32>
    %c14_274 = arith.constant 14 : index
    %c2_275 = arith.constant 2 : index
    %703 = memref.load %arg2[%c14_274, %c2_275] : memref<16x4xf32, #tpu.memory_space<smem>>
    %704 = vector.broadcast %703 : f32 to vector<1x256xf32>
    %705 = arith.select %702, %704, %700 : vector<1x256xi1>, vector<1x256xf32>
    %c15_i32_276 = arith.constant 15 : i32
    %706 = vector.broadcast %c15_i32_276 : i32 to vector<1x256xi32>
    %707 = arith.cmpi eq, %467, %706 : vector<1x256xi32>
    %c15_277 = arith.constant 15 : index
    %c2_278 = arith.constant 2 : index
    %708 = memref.load %arg2[%c15_277, %c2_278] : memref<16x4xf32, #tpu.memory_space<smem>>
    %709 = vector.broadcast %708 : f32 to vector<1x256xf32>
    %710 = arith.select %707, %709, %705 : vector<1x256xi1>, vector<1x256xf32>
    %cst_279 = arith.constant 0.000000e+00 : f32
    %711 = vector.broadcast %cst_279 : f32 to vector<1x256xf32>
    %c0_i32_280 = arith.constant 0 : i32
    %712 = vector.broadcast %c0_i32_280 : i32 to vector<1x256xi32>
    %713 = arith.cmpi eq, %467, %712 : vector<1x256xi32>
    %c0_281 = arith.constant 0 : index
    %c3_282 = arith.constant 3 : index
    %714 = memref.load %arg2[%c0_281, %c3_282] : memref<16x4xf32, #tpu.memory_space<smem>>
    %715 = vector.broadcast %714 : f32 to vector<1x256xf32>
    %716 = arith.select %713, %715, %711 : vector<1x256xi1>, vector<1x256xf32>
    %c1_i32_283 = arith.constant 1 : i32
    %717 = vector.broadcast %c1_i32_283 : i32 to vector<1x256xi32>
    %718 = arith.cmpi eq, %467, %717 : vector<1x256xi32>
    %c1_284 = arith.constant 1 : index
    %c3_285 = arith.constant 3 : index
    %719 = memref.load %arg2[%c1_284, %c3_285] : memref<16x4xf32, #tpu.memory_space<smem>>
    %720 = vector.broadcast %719 : f32 to vector<1x256xf32>
    %721 = arith.select %718, %720, %716 : vector<1x256xi1>, vector<1x256xf32>
    %c2_i32_286 = arith.constant 2 : i32
    %722 = vector.broadcast %c2_i32_286 : i32 to vector<1x256xi32>
    %723 = arith.cmpi eq, %467, %722 : vector<1x256xi32>
    %c2_287 = arith.constant 2 : index
    %c3_288 = arith.constant 3 : index
    %724 = memref.load %arg2[%c2_287, %c3_288] : memref<16x4xf32, #tpu.memory_space<smem>>
    %725 = vector.broadcast %724 : f32 to vector<1x256xf32>
    %726 = arith.select %723, %725, %721 : vector<1x256xi1>, vector<1x256xf32>
    %c3_i32_289 = arith.constant 3 : i32
    %727 = vector.broadcast %c3_i32_289 : i32 to vector<1x256xi32>
    %728 = arith.cmpi eq, %467, %727 : vector<1x256xi32>
    %c3_290 = arith.constant 3 : index
    %c3_291 = arith.constant 3 : index
    %729 = memref.load %arg2[%c3_290, %c3_291] : memref<16x4xf32, #tpu.memory_space<smem>>
    %730 = vector.broadcast %729 : f32 to vector<1x256xf32>
    %731 = arith.select %728, %730, %726 : vector<1x256xi1>, vector<1x256xf32>
    %c4_i32_292 = arith.constant 4 : i32
    %732 = vector.broadcast %c4_i32_292 : i32 to vector<1x256xi32>
    %733 = arith.cmpi eq, %467, %732 : vector<1x256xi32>
    %c4_293 = arith.constant 4 : index
    %c3_294 = arith.constant 3 : index
    %734 = memref.load %arg2[%c4_293, %c3_294] : memref<16x4xf32, #tpu.memory_space<smem>>
    %735 = vector.broadcast %734 : f32 to vector<1x256xf32>
    %736 = arith.select %733, %735, %731 : vector<1x256xi1>, vector<1x256xf32>
    %c5_i32_295 = arith.constant 5 : i32
    %737 = vector.broadcast %c5_i32_295 : i32 to vector<1x256xi32>
    %738 = arith.cmpi eq, %467, %737 : vector<1x256xi32>
    %c5_296 = arith.constant 5 : index
    %c3_297 = arith.constant 3 : index
    %739 = memref.load %arg2[%c5_296, %c3_297] : memref<16x4xf32, #tpu.memory_space<smem>>
    %740 = vector.broadcast %739 : f32 to vector<1x256xf32>
    %741 = arith.select %738, %740, %736 : vector<1x256xi1>, vector<1x256xf32>
    %c6_i32_298 = arith.constant 6 : i32
    %742 = vector.broadcast %c6_i32_298 : i32 to vector<1x256xi32>
    %743 = arith.cmpi eq, %467, %742 : vector<1x256xi32>
    %c6_299 = arith.constant 6 : index
    %c3_300 = arith.constant 3 : index
    %744 = memref.load %arg2[%c6_299, %c3_300] : memref<16x4xf32, #tpu.memory_space<smem>>
    %745 = vector.broadcast %744 : f32 to vector<1x256xf32>
    %746 = arith.select %743, %745, %741 : vector<1x256xi1>, vector<1x256xf32>
    %c7_i32_301 = arith.constant 7 : i32
    %747 = vector.broadcast %c7_i32_301 : i32 to vector<1x256xi32>
    %748 = arith.cmpi eq, %467, %747 : vector<1x256xi32>
    %c7_302 = arith.constant 7 : index
    %c3_303 = arith.constant 3 : index
    %749 = memref.load %arg2[%c7_302, %c3_303] : memref<16x4xf32, #tpu.memory_space<smem>>
    %750 = vector.broadcast %749 : f32 to vector<1x256xf32>
    %751 = arith.select %748, %750, %746 : vector<1x256xi1>, vector<1x256xf32>
    %c8_i32_304 = arith.constant 8 : i32
    %752 = vector.broadcast %c8_i32_304 : i32 to vector<1x256xi32>
    %753 = arith.cmpi eq, %467, %752 : vector<1x256xi32>
    %c8_305 = arith.constant 8 : index
    %c3_306 = arith.constant 3 : index
    %754 = memref.load %arg2[%c8_305, %c3_306] : memref<16x4xf32, #tpu.memory_space<smem>>
    %755 = vector.broadcast %754 : f32 to vector<1x256xf32>
    %756 = arith.select %753, %755, %751 : vector<1x256xi1>, vector<1x256xf32>
    %c9_i32_307 = arith.constant 9 : i32
    %757 = vector.broadcast %c9_i32_307 : i32 to vector<1x256xi32>
    %758 = arith.cmpi eq, %467, %757 : vector<1x256xi32>
    %c9_308 = arith.constant 9 : index
    %c3_309 = arith.constant 3 : index
    %759 = memref.load %arg2[%c9_308, %c3_309] : memref<16x4xf32, #tpu.memory_space<smem>>
    %760 = vector.broadcast %759 : f32 to vector<1x256xf32>
    %761 = arith.select %758, %760, %756 : vector<1x256xi1>, vector<1x256xf32>
    %c10_i32_310 = arith.constant 10 : i32
    %762 = vector.broadcast %c10_i32_310 : i32 to vector<1x256xi32>
    %763 = arith.cmpi eq, %467, %762 : vector<1x256xi32>
    %c10_311 = arith.constant 10 : index
    %c3_312 = arith.constant 3 : index
    %764 = memref.load %arg2[%c10_311, %c3_312] : memref<16x4xf32, #tpu.memory_space<smem>>
    %765 = vector.broadcast %764 : f32 to vector<1x256xf32>
    %766 = arith.select %763, %765, %761 : vector<1x256xi1>, vector<1x256xf32>
    %c11_i32_313 = arith.constant 11 : i32
    %767 = vector.broadcast %c11_i32_313 : i32 to vector<1x256xi32>
    %768 = arith.cmpi eq, %467, %767 : vector<1x256xi32>
    %c11_314 = arith.constant 11 : index
    %c3_315 = arith.constant 3 : index
    %769 = memref.load %arg2[%c11_314, %c3_315] : memref<16x4xf32, #tpu.memory_space<smem>>
    %770 = vector.broadcast %769 : f32 to vector<1x256xf32>
    %771 = arith.select %768, %770, %766 : vector<1x256xi1>, vector<1x256xf32>
    %c12_i32_316 = arith.constant 12 : i32
    %772 = vector.broadcast %c12_i32_316 : i32 to vector<1x256xi32>
    %773 = arith.cmpi eq, %467, %772 : vector<1x256xi32>
    %c12_317 = arith.constant 12 : index
    %c3_318 = arith.constant 3 : index
    %774 = memref.load %arg2[%c12_317, %c3_318] : memref<16x4xf32, #tpu.memory_space<smem>>
    %775 = vector.broadcast %774 : f32 to vector<1x256xf32>
    %776 = arith.select %773, %775, %771 : vector<1x256xi1>, vector<1x256xf32>
    %c13_i32_319 = arith.constant 13 : i32
    %777 = vector.broadcast %c13_i32_319 : i32 to vector<1x256xi32>
    %778 = arith.cmpi eq, %467, %777 : vector<1x256xi32>
    %c13_320 = arith.constant 13 : index
    %c3_321 = arith.constant 3 : index
    %779 = memref.load %arg2[%c13_320, %c3_321] : memref<16x4xf32, #tpu.memory_space<smem>>
    %780 = vector.broadcast %779 : f32 to vector<1x256xf32>
    %781 = arith.select %778, %780, %776 : vector<1x256xi1>, vector<1x256xf32>
    %c14_i32_322 = arith.constant 14 : i32
    %782 = vector.broadcast %c14_i32_322 : i32 to vector<1x256xi32>
    %783 = arith.cmpi eq, %467, %782 : vector<1x256xi32>
    %c14_323 = arith.constant 14 : index
    %c3_324 = arith.constant 3 : index
    %784 = memref.load %arg2[%c14_323, %c3_324] : memref<16x4xf32, #tpu.memory_space<smem>>
    %785 = vector.broadcast %784 : f32 to vector<1x256xf32>
    %786 = arith.select %783, %785, %781 : vector<1x256xi1>, vector<1x256xf32>
    %c15_i32_325 = arith.constant 15 : i32
    %787 = vector.broadcast %c15_i32_325 : i32 to vector<1x256xi32>
    %788 = arith.cmpi eq, %467, %787 : vector<1x256xi32>
    %c15_326 = arith.constant 15 : index
    %c3_327 = arith.constant 3 : index
    %789 = memref.load %arg2[%c15_326, %c3_327] : memref<16x4xf32, #tpu.memory_space<smem>>
    %790 = vector.broadcast %789 : f32 to vector<1x256xf32>
    %791 = arith.select %788, %790, %786 : vector<1x256xi1>, vector<1x256xf32>
    %792 = tpu.concatenate %548, %629, %710, %791 in 0 : vector<1x256xf32>, vector<1x256xf32>, vector<1x256xf32>, vector<1x256xf32> -> vector<4x256xf32>
    %c0_328 = arith.constant 0 : index
    %c0_329 = arith.constant 0 : index
    %c0_330 = arith.constant 0 : index
    %793 = vector.load %arg4[%c0_328, %c0_329, %c0_330] : memref<1x4x256xf32, #tpu.memory_space<vmem>>, vector<1x4x256xf32>
    %794 = vector.shape_cast %793 : vector<1x4x256xf32> to vector<4x256xf32>
    %795 = vector.shape_cast %792 : vector<4x256xf32> to vector<1x4x256xf32>
    tpu.vector_store %arg4[%c0_328, %c0_329, %c0_330], %795 {strides = array<i32>} : memref<1x4x256xf32, #tpu.memory_space<vmem>>, vector<1x4x256xf32>,
    %c0_331 = arith.constant 0 : index
    %c0_332 = arith.constant 0 : index
    %c0_333 = arith.constant 0 : index
    %796 = vector.load %arg5[%c0_331, %c0_332, %c0_333] : memref<1x1x256xi32, #tpu.memory_space<vmem>>, vector<1x1x256xi32>
    %797 = vector.shape_cast %796 : vector<1x1x256xi32> to vector<1x256xi32>
    %798 = vector.shape_cast %467 : vector<1x256xi32> to vector<1x1x256xi32>
    tpu.vector_store %arg5[%c0_331, %c0_332, %c0_333], %798 {strides = array<i32>} : memref<1x1x256xi32, #tpu.memory_space<vmem>>, vector<1x1x256xi32>,
    %c0_334 = arith.constant 0 : index
    %c0_335 = arith.constant 0 : index
    %c0_336 = arith.constant 0 : index
    %799 = vector.load %arg6[%c0_334, %c0_335, %c0_336] : memref<1x1x256xf32, #tpu.memory_space<vmem>>, vector<1x1x256xf32>
    %800 = vector.shape_cast %799 : vector<1x1x256xf32> to vector<1x256xf32>
    %801 = vector.shape_cast %465 : vector<1x256xf32> to vector<1x1x256xf32>
    tpu.vector_store %arg6[%c0_334, %c0_335, %c0_336], %801 {strides = array<i32>} : memref<1x1x256xf32, #tpu.memory_space<vmem>>, vector<1x1x256xf32>,
    return
  }
  func.func @transform_0(%arg0: i32, %arg1: i32) -> (i32, i32) {
    %c0_i32 = arith.constant 0 : i32
    %c0_i32_0 = arith.constant 0 : i32
    %c0_i32_1 = arith.constant 0 : i32
    return %c0_i32, %c0_i32_0 : i32, i32
  }
  func.func @transform_1(%arg0: i32, %arg1: i32) -> (i32, i32, i32) {
    %c0_i32 = arith.constant 0 : i32
    %c0_i32_0 = arith.constant 0 : i32
    return %arg0, %c0_i32, %arg1 : i32, i32, i32
  }
  func.func @transform_2(%arg0: i32, %arg1: i32) -> (i32, i32, i32) {
    %c0_i32 = arith.constant 0 : i32
    %c0_i32_0 = arith.constant 0 : i32
    return %arg0, %c0_i32, %arg1 : i32, i32, i32
  }
  func.func @transform_3(%arg0: i32, %arg1: i32) -> (i32, i32, i32) {
    %c0_i32 = arith.constant 0 : i32
    %c0_i32_0 = arith.constant 0 : i32
    return %arg0, %c0_i32, %arg1 : i32, i32, i32
  }
  func.func @transform_4(%arg0: i32, %arg1: i32) -> (i32, i32, i32) {
    %c0_i32 = arith.constant 0 : i32
    %c0_i32_0 = arith.constant 0 : i32
    return %arg0, %c0_i32, %arg1 : i32, i32, i32
  }
}

</mosaic_0001>

<llo_original>
// kernel: tpu_custom_call.1
$region0: #{tpu_custom_call.1}
  #allocation0 [shape = 'u32[]', space=smem, size = 0x4, offset = 0x4, fixed_abs, tag = 'smem constant byte address 0x4 - core index']
  #allocation1 [shape = 'u32[144,128]{1,0:T(1,128)}', space=vmem, size = 0x12000, scoped, tag = 'internal scratch']
  %s0 = inlined_call_operand.vmem [shape: f32[16,4], index: 0, kind: input, shape index: {}]
  %s1 = inlined_call_operand.vmem [shape: f32[2,4,256], index: 1, kind: input, shape index: {}]
  %s2 = inlined_call_operand.hbm [shape: f32[2,4,256], index: 2, kind: output, shape index: {0}]
  %s3 = inlined_call_operand.hbm [shape: s32[2,1,256], index: 3, kind: output, shape index: {1}]
  %s4 = inlined_call_operand.hbm [shape: f32[2,1,256], index: 4, kind: output, shape index: {2}]
  %5 = xla_tuple %s2, %s3, %s4
  %s6 = sld [smem:[#allocation0]]
  $region61: #{tpu_custom_call.1} parent=0
    _
  %s8 = ssub.s32 1, %s6
  %s9 = scalar_select 0, %s8, %s6
  $region1: #{tpu_custom_call.1} parent=0
    #allocation2 [shape = 'u8[8192]{0}', space=smem, size = 0x2000, scoped, tag = 'input window, operand 0, single buffered']
    #allocation3 [shape = 's32[2]{0}', space=sflag, size = 0x8, scoped, tag = 'scoped memory for tpu_custom_call.1']
    #allocation4 [shape = 's32[2]{0}', space=sflag, size = 0x8, scoped, tag = 'scoped memory for tpu_custom_call.1']
    #allocation5 [shape = 'u8[8192]{0}', space=vmem, size = 0x2000, scoped, tag = 'output window, operand 0']
    #allocation6 [shape = 'u8[2048]{0}', space=vmem, size = 0x800, scoped, tag = 'output window, operand 1']
    #allocation7 [shape = 's32[2]{0}', space=sflag, size = 0x8, scoped, tag = 'scoped memory for tpu_custom_call.1']
    #allocation8 [shape = 'u8[2048]{0}', space=vmem, size = 0x800, scoped, tag = 'output window, operand 2']
    %10 = vsyncpa [#allocation4], 0
    %11 = vsyncpa [#allocation3], 0
    %s12 = scalar_lea.sflag [#allocation3], 1
    %13 = vsyncpa %s12, 0
    %14 = vsyncpa [#allocation7], 0
    %s15 = scalar_lea.sflag [#allocation7], 1
    %16 = vsyncpa %s15, 0
    loop: start=0, step=1, limit=4
    $region2: #{tpu_custom_call.1} parent=1 // loop_pre_header
      _
    $region3: #{tpu_custom_call.1} parent=1 // loop_header
      %s18 = sphi 0, %s22
      %p19 = scmp.ge.s32.totalorder %s18, 4
      %s25 = sphi 0, %s37
      %s26 = sphi 0, %s33
      %s27 = sphi 0, %s25
      %s28 = sphi 0, %s26
      %s29 = sphi 0, %s27
      %s30 = sphi 0, %s28
      %s38 = sphi 0, %s38
      %s40 = sphi 0, %s38
      %s41 = sphi 0, %s40
      %s55 = sphi 0, %s41
      %s63 = sphi 0, %s65
      %s66 = sphi 0, %s63
      %s67 = sphi 0, %s66
      %s83 = sphi 0, %s67
      %s91 = sphi 0, %s93
      %s94 = sphi 0, %s91
      %s95 = sphi 0, %s94
      %s111 = sphi 0, %s95
      %s119 = sphi 0, %s121
      %s122 = sphi 0, %s119
      %s123 = sphi 0, %s122
      %s139 = sphi 0, %s123
      %s147 = sphi 0, %s149
      %s150 = sphi 0, %s147
      %s151 = sphi 0, %s150
      %s167 = sphi 0, %s151
    $region4: #{tpu_custom_call.1} parent=1 // loop_header_branch
      %21 = sbr.rel (%p19) target = $region8
    $region5: #{tpu_custom_call.1} parent=1 // loop_body
      %s23 = ssub.s32 %s18, 1
      %s24 = ssub.s32 %s18, 2
      %s31 = sadd.s32 1, %s26
      %p32 = scmp.ge.s32.totalorder %s31, 1
      %s33 = scalar_select %p32, 0, %s31
      %s34 = sadd.s32 1, %s25
      %s35 = scalar_select %p32, %s34, %s25
      %p36 = scmp.ge.s32.totalorder %s35, 2
      %s37 = scalar_select %p36, 0, %s35
      %s39 = sadd.s32 %s38, 1
      %p42 = scmp.eq.s32.totalorder %s18, 1
      %p43 = scmp.ne.s32.totalorder %s38, %s40
      %p44 = scmp.eq.s32.totalorder %s18, 0
      %p45 = por %p43, %p44
      %p46 = scmp.ne.s32.totalorder %s38, %s40
      %p47 = scmp.eq.s32.totalorder %s23, 1
      %p48 = por %p46, %p47
      %p49 = scmp.ne.s32.totalorder %s40, %s41
      %p50 = scmp.eq.s32.totalorder %s23, 0
      %p51 = por %p49, %p50
      %p52 = scmp.ne.s32.totalorder %s40, %s41
      %p53 = scmp.eq.s32.totalorder %s24, 1
      %p54 = por %p52, %p53
      %p56 = scmp.ne.s32.totalorder %s41, %s55
      %p57 = scmp.eq.s32.totalorder %s24, 0
      %p58 = por %p56, %p57
      %s59 = ssub.s32 %s25, %s37
      %s60 = ssub.s32 %s26, %s33
      %s61 = sor.u32 %s59, %s60
      %p62 = scmp.eq.s32.totalorder %s61, 0
      %s64 = sadd.s32 %s63, 1
      %s65 = scalar_select %p62, %s63, %s64
      %p68 = pneg %p62
      %p69 = scmp.eq.s32.totalorder %s18, 1
      %p70 = por %p68, %p69
      %p71 = scmp.ne.s32.totalorder %s63, %s66
      %p72 = scmp.eq.s32.totalorder %s18, 0
      %p73 = por %p71, %p72
      %p74 = scmp.ne.s32.totalorder %s63, %s66
      %p75 = scmp.eq.s32.totalorder %s23, 1
      %p76 = por %p74, %p75
      %p77 = scmp.ne.s32.totalorder %s66, %s67
      %p78 = scmp.eq.s32.totalorder %s23, 0
      %p79 = por %p77, %p78
      %p80 = scmp.ne.s32.totalorder %s66, %s67
      %p81 = scmp.eq.s32.totalorder %s24, 1
      %p82 = por %p80, %p81
      %p84 = scmp.ne.s32.totalorder %s67, %s83
      %p85 = scmp.eq.s32.totalorder %s24, 0
      %p86 = por %p84, %p85
      %s87 = ssub.s32 %s25, %s37
      %s88 = ssub.s32 %s26, %s33
      %s89 = sor.u32 %s87, %s88
      %p90 = scmp.eq.s32.totalorder %s89, 0
      %s92 = sadd.s32 %s91, 1
      %s93 = scalar_select %p90, %s91, %s92
      %p96 = pneg %p90
      %p97 = scmp.eq.s32.totalorder %s18, 1
      %p98 = por %p96, %p97
      %p99 = scmp.ne.s32.totalorder %s91, %s94
      %p100 = scmp.eq.s32.totalorder %s18, 0
      %p101 = por %p99, %p100
      %p102 = scmp.ne.s32.totalorder %s91, %s94
      %p103 = scmp.eq.s32.totalorder %s23, 1
      %p104 = por %p102, %p103
      %p105 = scmp.ne.s32.totalorder %s94, %s95
      %p106 = scmp.eq.s32.totalorder %s23, 0
      %p107 = por %p105, %p106
      %p108 = scmp.ne.s32.totalorder %s94, %s95
      %p109 = scmp.eq.s32.totalorder %s24, 1
      %p110 = por %p108, %p109
      %p112 = scmp.ne.s32.totalorder %s95, %s111
      %p113 = scmp.eq.s32.totalorder %s24, 0
      %p114 = por %p112, %p113
      %s115 = ssub.s32 %s25, %s37
      %s116 = ssub.s32 %s26, %s33
      %s117 = sor.u32 %s115, %s116
      %p118 = scmp.eq.s32.totalorder %s117, 0
      %s120 = sadd.s32 %s119, 1
      %s121 = scalar_select %p118, %s119, %s120
      %p124 = pneg %p118
      %p125 = scmp.eq.s32.totalorder %s18, 1
      %p126 = por %p124, %p125
      %p127 = scmp.ne.s32.totalorder %s119, %s122
      %p128 = scmp.eq.s32.totalorder %s18, 0
      %p129 = por %p127, %p128
      %p130 = scmp.ne.s32.totalorder %s119, %s122
      %p131 = scmp.eq.s32.totalorder %s23, 1
      %p132 = por %p130, %p131
      %p133 = scmp.ne.s32.totalorder %s122, %s123
      %p134 = scmp.eq.s32.totalorder %s23, 0
      %p135 = por %p133, %p134
      %p136 = scmp.ne.s32.totalorder %s122, %s123
      %p137 = scmp.eq.s32.totalorder %s24, 1
      %p138 = por %p136, %p137
      %p140 = scmp.ne.s32.totalorder %s123, %s139
      %p141 = scmp.eq.s32.totalorder %s24, 0
      %p142 = por %p140, %p141
      %s143 = ssub.s32 %s25, %s37
      %s144 = ssub.s32 %s26, %s33
      %s145 = sor.u32 %s143, %s144
      %p146 = scmp.eq.s32.totalorder %s145, 0
      %s148 = sadd.s32 %s147, 1
      %s149 = scalar_select %p146, %s147, %s148
      %p152 = pneg %p146
      %p153 = scmp.eq.s32.totalorder %s18, 1
      %p154 = por %p152, %p153
      %p155 = scmp.ne.s32.totalorder %s147, %s150
      %p156 = scmp.eq.s32.totalorder %s18, 0
      %p157 = por %p155, %p156
      %p158 = scmp.ne.s32.totalorder %s147, %s150
      %p159 = scmp.eq.s32.totalorder %s23, 1
      %p160 = por %p158, %p159
      %p161 = scmp.ne.s32.totalorder %s150, %s151
      %p162 = scmp.eq.s32.totalorder %s23, 0
      %p163 = por %p161, %p162
      %p164 = scmp.ne.s32.totalorder %s150, %s151
      %p165 = scmp.eq.s32.totalorder %s24, 1
      %p166 = por %p164, %p165
      %p168 = scmp.ne.s32.totalorder %s151, %s167
      %p169 = scmp.eq.s32.totalorder %s24, 0
      %p170 = por %p168, %p169
      %p171 = scmp.le.s32.totalorder 1, %s18
      %p172 = scmp.lt.s32.totalorder %s18, 3
      %p173 = pnand %p171, %p172
      %p174 = pneg %p173
      // Predicated region
      $region9: #{tpu_custom_call.1} parent=5 // pred_check
        _
      $region10: #{tpu_custom_call.1} parent=5 // pred_check_branch
        %176 = sbr.rel (%p173) target = $region12
      $region11: #{tpu_custom_call.1} parent=5 // pred_region
        %s177 = ssub.s32 %s18, 1
        // Predicated region
        $region13: #{tpu_custom_call.1} parent=11 // pred_check
          %p178 = pneg %p51
        $region14: #{tpu_custom_call.1} parent=11 // pred_check_branch
          %180 = sbr.rel (%p178) target = $region16
        $region15: #{tpu_custom_call.1} parent=11 // pred_region
          %s182 = ssub.s32 256, 256
          %183 = vsyncadd [#allocation4], %s182
          %s184 = sshll.u32 %s0, 4
          %s185 = int_to_ptr.vmem [resolvable:$true] %s184
          %190 = dma.vmem_to_smem %s185, 256, [#allocation2], [#allocation4], 128, 128, 8
        $region16: #{tpu_custom_call.1} parent=11 // pred_fallthru
          _
      $region12: #{tpu_custom_call.1} parent=5 // pred_fallthru
        _
      %p191 = scmp.lt.s32.totalorder %s18, 2
      // Predicated region
      $region17: #{tpu_custom_call.1} parent=5 // pred_check
        %p192 = pneg %p191
      $region18: #{tpu_custom_call.1} parent=5 // pred_check_branch
        %194 = sbr.rel (%p192) target = $region20
      $region19: #{tpu_custom_call.1} parent=5 // pred_region
        // Predicated region
        $region21: #{tpu_custom_call.1} parent=19 // pred_check
          %p195 = pneg %p73
        $region22: #{tpu_custom_call.1} parent=19 // pred_check_branch
          %197 = sbr.rel (%p195) target = $region24
        $region23: #{tpu_custom_call.1} parent=19 // pred_region
          %s198 = smul.u32 2, %s26
          %p199 = scmp.lt.s32.totalorder %s25, 1
          %s200 = scalar_select %p199, %s25, 1
          %p201 = scmp.lt.s32.totalorder %s198, 1
          %s202 = scalar_select %p201, %s198, 1
          %s203 = smul.addr %s200, 2
          %s204 = sadd.s32 %s202, %s203
          %s205 = smul.addr %s204, 4
          %s206 = scalar_lea.vmem %s1, %s205
          %s207 = smul.u32 2, %s26
        $region24: #{tpu_custom_call.1} parent=19 // pred_fallthru
          _
      $region20: #{tpu_custom_call.1} parent=5 // pred_fallthru
        _
      %p208 = scmp.le.s32.totalorder 1, %s18
      %p209 = scmp.lt.s32.totalorder %s18, 3
      %p210 = pnand %p208, %p209
      %p211 = pneg %p210
      // Predicated region
      $region25: #{tpu_custom_call.1} parent=5 // pred_check
        _
      $region26: #{tpu_custom_call.1} parent=5 // pred_check_branch
        %213 = sbr.rel (%p210) target = $region28
      $region27: #{tpu_custom_call.1} parent=5 // pred_region
        %s214 = ssub.s32 %s18, 1
        // Predicated region
        $region29: #{tpu_custom_call.1} parent=27 // pred_check
          %p215 = pneg %p51
        $region30: #{tpu_custom_call.1} parent=27 // pred_check_branch
          %217 = sbr.rel (%p215) target = $region32
        $region31: #{tpu_custom_call.1} parent=27 // pred_region
          %218 = dma.done [#allocation4], 256
        $region32: #{tpu_custom_call.1} parent=27 // pred_fallthru
          _
        %219 = sfence
        %p220 = pneg %p51
        %p221 = pneg %p48
        %s222 = smul.u32 2, %s28
        %p223 = scmp.lt.s32.totalorder %s27, 1
        %s224 = scalar_select %p223, %s27, 1
        %p225 = scmp.lt.s32.totalorder %s222, 1
        %s226 = scalar_select %p225, %s222, 1
        %s227 = smul.addr %s224, 2
        %s228 = sadd.s32 %s226, %s227
        %s229 = smul.addr %s228, 4
        %s230 = scalar_lea.vmem %s1, %s229
        %p231 = pneg %p79
        %p232 = pneg %p76
        %p233 = pneg %p107
        %p234 = pneg %p104
        %s235 = sand.u32 %s94, 1
        %s236 = scalar_lea.sflag [#allocation3], %s235
        %s237 = sand.u32 %s94, 1
        %s238 = smul.addr %s237, 8
        %s239 = scalar_lea.vmem [#allocation5], %s238
        %p240 = pneg %p135
        %p241 = pneg %p132
        %s242 = sand.u32 %s23, 1
        %s243 = scalar_lea.sflag [#allocation7], %s242
        %s244 = sand.u32 %s122, 1
        %s245 = smul.addr %s244, 2
        %s246 = scalar_lea.vmem [#allocation6], %s245
        %p247 = pneg %p163
        %p248 = pneg %p160
        %s249 = sand.u32 %s23, 1
        %s250 = scalar_lea.sflag [#allocation7], %s249
        %s251 = sand.u32 %s150, 1
        %s252 = smul.addr %s251, 2
        %s253 = scalar_lea.vmem [#allocation8], %s252
        %s254 = smul.u32 2, %s28
        %p255 = scmp.lt.s32.totalorder %s27, 1
        %s256 = scalar_select %p255, %s27, 1
        %p257 = scmp.lt.s32.totalorder %s254, 1
        %s258 = scalar_select %p257, %s254, 1
        %s259 = smul.addr %s256, 2
        %s260 = sadd.s32 %s258, %s259
        %s261 = smul.addr %s260, 4
        %s262 = scalar_lea.vmem %s1, %s261
        %s263 = smul.u32 2, %s28
        %s264 = smul.u32 2, %s28
        %s265 = smul.u32 2, %s28
        %s266 = smul.u32 2, %s28
        %v267 = vld [vmem:[%s262] sm:$0xff]
        %s268 = sld [smem:[#allocation2]]
        %v269 = vstv %s268
        %v270 = vsub.f32 %v267, %v269
        %v271 = vmul.f32 %v270, %v270
        %v272 = vadd.f32 %v271, 0.0
        %s273 = sld [smem:[#allocation2 + $0x1]]
        %v274 = vstv %s273
        %v275 = vsub.f32 %v267, %v274
        %v276 = vmul.f32 %v275, %v275
        %v278 = vrot.slane %v276, 5
        %v279 = vrot.slane %v278, 4
        %v281 = vadd.f32 %v272, %v279
        %s282 = sld [smem:[#allocation2 + $0x2]]
        %v283 = vstv %s282
        %v284 = vsub.f32 %v267, %v283
        %v285 = vmul.f32 %v284, %v284
        %v287 = vrot.slane %v285, 6
        %v288 = vrot.slane %v287, 4
        %v290 = vadd.f32 %v281, %v288
        %s291 = sld [smem:[#allocation2 + $0x3]]
        %v292 = vstv %s291
        %v293 = vsub.f32 %v267, %v292
        %v294 = vmul.f32 %v293, %v293
        %v296 = vrot.slane %v294, 7
        %v297 = vrot.slane %v296, 4
        %v299 = vadd.f32 %v290, %v297
        %vm300 = vcmp.lt.f32.partialorder %v299, inf
        %v301 = vsel %vm300, %v299, inf
        %s302 = sld [smem:[#allocation2 + $0x80]]
        %v303 = vstv %s302
        %v304 = vsub.f32 %v267, %v303
        %v305 = vmul.f32 %v304, %v304
        %v306 = vadd.f32 %v305, 0.0
        %s307 = sld [smem:[#allocation2 + $0x81]]
        %v308 = vstv %s307
        %v309 = vsub.f32 %v267, %v308
        %v310 = vmul.f32 %v309, %v309
        %v312 = vrot.slane %v310, 5
        %v313 = vrot.slane %v312, 4
        %v315 = vadd.f32 %v306, %v313
        %s316 = sld [smem:[#allocation2 + $0x82]]
        %v317 = vstv %s316
        %v318 = vsub.f32 %v267, %v317
        %v319 = vmul.f32 %v318, %v318
        %v321 = vrot.slane %v319, 6
        %v322 = vrot.slane %v321, 4
        %v324 = vadd.f32 %v315, %v322
        %s325 = sld [smem:[#allocation2 + $0x83]]
        %v326 = vstv %s325
        %v327 = vsub.f32 %v267, %v326
        %v328 = vmul.f32 %v327, %v327
        %v330 = vrot.slane %v328, 7
        %v331 = vrot.slane %v330, 4
        %v333 = vadd.f32 %v324, %v331
        %vm334 = vcmp.lt.f32.partialorder %v333, %v301
        %v335 = vsel %vm334, %v333, %v301
        %v336 = vsel %vm334, 1, 0
        %s337 = sld [smem:[#allocation2 + $0x100]]
        %v338 = vstv %s337
        %v339 = vsub.f32 %v267, %v338
        %v340 = vmul.f32 %v339, %v339
        %v341 = vadd.f32 %v340, 0.0
        %s342 = sld [smem:[#allocation2 + $0x101]]
        %v343 = vstv %s342
        %v344 = vsub.f32 %v267, %v343
        %v345 = vmul.f32 %v344, %v344
        %v347 = vrot.slane %v345, 5
        %v348 = vrot.slane %v347, 4
        %v350 = vadd.f32 %v341, %v348
        %s351 = sld [smem:[#allocation2 + $0x102]]
        %v352 = vstv %s351
        %v353 = vsub.f32 %v267, %v352
        %v354 = vmul.f32 %v353, %v353
        %v356 = vrot.slane %v354, 6
        %v357 = vrot.slane %v356, 4
        %v359 = vadd.f32 %v350, %v357
        %s360 = sld [smem:[#allocation2 + $0x103]]
        %v361 = vstv %s360
        %v362 = vsub.f32 %v267, %v361
        %v363 = vmul.f32 %v362, %v362
        %v365 = vrot.slane %v363, 7
        %v366 = vrot.slane %v365, 4
        %v368 = vadd.f32 %v359, %v366
        %vm369 = vcmp.lt.f32.partialorder %v368, %v335
        %v370 = vsel %vm369, %v368, %v335
        %v371 = vsel %vm369, 2, %v336
        %s372 = sld [smem:[#allocation2 + $0x180]]
        %v373 = vstv %s372
        %v374 = vsub.f32 %v267, %v373
        %v375 = vmul.f32 %v374, %v374
        %v376 = vadd.f32 %v375, 0.0
        %s377 = sld [smem:[#allocation2 + $0x181]]
        %v378 = vstv %s377
        %v379 = vsub.f32 %v267, %v378
        %v380 = vmul.f32 %v379, %v379
        %v382 = vrot.slane %v380, 5
        %v383 = vrot.slane %v382, 4
        %v385 = vadd.f32 %v376, %v383
        %s386 = sld [smem:[#allocation2 + $0x182]]
        %v387 = vstv %s386
        %v388 = vsub.f32 %v267, %v387
        %v389 = vmul.f32 %v388, %v388
        %v391 = vrot.slane %v389, 6
        %v392 = vrot.slane %v391, 4
        %v394 = vadd.f32 %v385, %v392
        %s395 = sld [smem:[#allocation2 + $0x183]]
        %v396 = vstv %s395
        %v397 = vsub.f32 %v267, %v396
        %v398 = vmul.f32 %v397, %v397
        %v400 = vrot.slane %v398, 7
        %v401 = vrot.slane %v400, 4
        %v403 = vadd.f32 %v394, %v401
        %vm404 = vcmp.lt.f32.partialorder %v403, %v370
        %v405 = vsel %vm404, %v403, %v370
        %v406 = vsel %vm404, 3, %v371
        %s407 = sld [smem:[#allocation2 + $0x200]]
        %v408 = vstv %s407
        %v409 = vsub.f32 %v267, %v408
        %v410 = vmul.f32 %v409, %v409
        %v411 = vadd.f32 %v410, 0.0
        %s412 = sld [smem:[#allocation2 + $0x201]]
        %v413 = vstv %s412
        %v414 = vsub.f32 %v267, %v413
        %v415 = vmul.f32 %v414, %v414
        %v417 = vrot.slane %v415, 5
        %v418 = vrot.slane %v417, 4
        %v420 = vadd.f32 %v411, %v418
        %s421 = sld [smem:[#allocation2 + $0x202]]
        %v422 = vstv %s421
        %v423 = vsub.f32 %v267, %v422
        %v424 = vmul.f32 %v423, %v423
        %v426 = vrot.slane %v424, 6
        %v427 = vrot.slane %v426, 4
        %v429 = vadd.f32 %v420, %v427
        %s430 = sld [smem:[#allocation2 + $0x203]]
        %v431 = vstv %s430
        %v432 = vsub.f32 %v267, %v431
        %v433 = vmul.f32 %v432, %v432
        %v435 = vrot.slane %v433, 7
        %v436 = vrot.slane %v435, 4
        %v438 = vadd.f32 %v429, %v436
        %vm439 = vcmp.lt.f32.partialorder %v438, %v405
        %v440 = vsel %vm439, %v438, %v405
        %v441 = vsel %vm439, 4, %v406
        %s442 = sld [smem:[#allocation2 + $0x280]]
        %v443 = vstv %s442
        %v444 = vsub.f32 %v267, %v443
        %v445 = vmul.f32 %v444, %v444
        %v446 = vadd.f32 %v445, 0.0
        %s447 = sld [smem:[#allocation2 + $0x281]]
        %v448 = vstv %s447
        %v449 = vsub.f32 %v267, %v448
        %v450 = vmul.f32 %v449, %v449
        %v452 = vrot.slane %v450, 5
        %v453 = vrot.slane %v452, 4
        %v455 = vadd.f32 %v446, %v453
        %s456 = sld [smem:[#allocation2 + $0x282]]
        %v457 = vstv %s456
        %v458 = vsub.f32 %v267, %v457
        %v459 = vmul.f32 %v458, %v458
        %v461 = vrot.slane %v459, 6
        %v462 = vrot.slane %v461, 4
        %v464 = vadd.f32 %v455, %v462
        %s465 = sld [smem:[#allocation2 + $0x283]]
        %v466 = vstv %s465
        %v467 = vsub.f32 %v267, %v466
        %v468 = vmul.f32 %v467, %v467
        %v470 = vrot.slane %v468, 7
        %v471 = vrot.slane %v470, 4
        %v473 = vadd.f32 %v464, %v471
        %vm474 = vcmp.lt.f32.partialorder %v473, %v440
        %v475 = vsel %vm474, %v473, %v440
        %v476 = vsel %vm474, 5, %v441
        %s477 = sld [smem:[#allocation2 + $0x300]]
        %v478 = vstv %s477
        %v479 = vsub.f32 %v267, %v478
        %v480 = vmul.f32 %v479, %v479
        %v481 = vadd.f32 %v480, 0.0
        %s482 = sld [smem:[#allocation2 + $0x301]]
        %v483 = vstv %s482
        %v484 = vsub.f32 %v267, %v483
        %v485 = vmul.f32 %v484, %v484
        %v487 = vrot.slane %v485, 5
        %v488 = vrot.slane %v487, 4
        %v490 = vadd.f32 %v481, %v488
        %s491 = sld [smem:[#allocation2 + $0x302]]
        %v492 = vstv %s491
        %v493 = vsub.f32 %v267, %v492
        %v494 = vmul.f32 %v493, %v493
        %v496 = vrot.slane %v494, 6
        %v497 = vrot.slane %v496, 4
        %v499 = vadd.f32 %v490, %v497
        %s500 = sld [smem:[#allocation2 + $0x303]]
        %v501 = vstv %s500
        %v502 = vsub.f32 %v267, %v501
        %v503 = vmul.f32 %v502, %v502
        %v505 = vrot.slane %v503, 7
        %v506 = vrot.slane %v505, 4
        %v508 = vadd.f32 %v499, %v506
        %vm509 = vcmp.lt.f32.partialorder %v508, %v475
        %v510 = vsel %vm509, %v508, %v475
        %v511 = vsel %vm509, 6, %v476
        %s512 = sld [smem:[#allocation2 + $0x380]]
        %v513 = vstv %s512
        %v514 = vsub.f32 %v267, %v513
        %v515 = vmul.f32 %v514, %v514
        %v516 = vadd.f32 %v515, 0.0
        %s517 = sld [smem:[#allocation2 + $0x381]]
        %v518 = vstv %s517
        %v519 = vsub.f32 %v267, %v518
        %v520 = vmul.f32 %v519, %v519
        %v522 = vrot.slane %v520, 5
        %v523 = vrot.slane %v522, 4
        %v525 = vadd.f32 %v516, %v523
        %s526 = sld [smem:[#allocation2 + $0x382]]
        %v527 = vstv %s526
        %v528 = vsub.f32 %v267, %v527
        %v529 = vmul.f32 %v528, %v528
        %v531 = vrot.slane %v529, 6
        %v532 = vrot.slane %v531, 4
        %v534 = vadd.f32 %v525, %v532
        %s535 = sld [smem:[#allocation2 + $0x383]]
        %v536 = vstv %s535
        %v537 = vsub.f32 %v267, %v536
        %v538 = vmul.f32 %v537, %v537
        %v540 = vrot.slane %v538, 7
        %v541 = vrot.slane %v540, 4
        %v543 = vadd.f32 %v534, %v541
        %vm544 = vcmp.lt.f32.partialorder %v543, %v510
        %v545 = vsel %vm544, %v543, %v510
        %v546 = vsel %vm544, 7, %v511
        %s547 = sld [smem:[#allocation2 + $0x400]]
        %v548 = vstv %s547
        %v549 = vsub.f32 %v267, %v548
        %v550 = vmul.f32 %v549, %v549
        %v551 = vadd.f32 %v550, 0.0
        %s552 = sld [smem:[#allocation2 + $0x401]]
        %v553 = vstv %s552
        %v554 = vsub.f32 %v267, %v553
        %v555 = vmul.f32 %v554, %v554
        %v557 = vrot.slane %v555, 5
        %v558 = vrot.slane %v557, 4
        %v560 = vadd.f32 %v551, %v558
        %s561 = sld [smem:[#allocation2 + $0x402]]
        %v562 = vstv %s561
        %v563 = vsub.f32 %v267, %v562
        %v564 = vmul.f32 %v563, %v563
        %v566 = vrot.slane %v564, 6
        %v567 = vrot.slane %v566, 4
        %v569 = vadd.f32 %v560, %v567
        %s570 = sld [smem:[#allocation2 + $0x403]]
        %v571 = vstv %s570
        %v572 = vsub.f32 %v267, %v571
        %v573 = vmul.f32 %v572, %v572
        %v575 = vrot.slane %v573, 7
        %v576 = vrot.slane %v575, 4
        %v578 = vadd.f32 %v569, %v576
        %vm579 = vcmp.lt.f32.partialorder %v578, %v545
        %v580 = vsel %vm579, %v578, %v545
        %v581 = vsel %vm579, 8, %v546
        %s582 = sld [smem:[#allocation2 + $0x480]]
        %v583 = vstv %s582
        %v584 = vsub.f32 %v267, %v583
        %v585 = vmul.f32 %v584, %v584
        %v586 = vadd.f32 %v585, 0.0
        %s587 = sld [smem:[#allocation2 + $0x481]]
        %v588 = vstv %s587
        %v589 = vsub.f32 %v267, %v588
        %v590 = vmul.f32 %v589, %v589
        %v592 = vrot.slane %v590, 5
        %v593 = vrot.slane %v592, 4
        %v595 = vadd.f32 %v586, %v593
        %s596 = sld [smem:[#allocation2 + $0x482]]
        %v597 = vstv %s596
        %v598 = vsub.f32 %v267, %v597
        %v599 = vmul.f32 %v598, %v598
        %v601 = vrot.slane %v599, 6
        %v602 = vrot.slane %v601, 4
        %v604 = vadd.f32 %v595, %v602
        %s605 = sld [smem:[#allocation2 + $0x483]]
        %v606 = vstv %s605
        %v607 = vsub.f32 %v267, %v606
        %v608 = vmul.f32 %v607, %v607
        %v610 = vrot.slane %v608, 7
        %v611 = vrot.slane %v610, 4
        %v613 = vadd.f32 %v604, %v611
        %vm614 = vcmp.lt.f32.partialorder %v613, %v580
        %v615 = vsel %vm614, %v613, %v580
        %v616 = vsel %vm614, 9, %v581
        %s617 = sld [smem:[#allocation2 + $0x500]]
        %v618 = vstv %s617
        %v619 = vsub.f32 %v267, %v618
        %v620 = vmul.f32 %v619, %v619
        %v621 = vadd.f32 %v620, 0.0
        %s622 = sld [smem:[#allocation2 + $0x501]]
        %v623 = vstv %s622
        %v624 = vsub.f32 %v267, %v623
        %v625 = vmul.f32 %v624, %v624
        %v627 = vrot.slane %v625, 5
        %v628 = vrot.slane %v627, 4
        %v630 = vadd.f32 %v621, %v628
        %s631 = sld [smem:[#allocation2 + $0x502]]
        %v632 = vstv %s631
        %v633 = vsub.f32 %v267, %v632
        %v634 = vmul.f32 %v633, %v633
        %v636 = vrot.slane %v634, 6
        %v637 = vrot.slane %v636, 4
        %v639 = vadd.f32 %v630, %v637
        %s640 = sld [smem:[#allocation2 + $0x503]]
        %v641 = vstv %s640
        %v642 = vsub.f32 %v267, %v641
        %v643 = vmul.f32 %v642, %v642
        %v645 = vrot.slane %v643, 7
        %v646 = vrot.slane %v645, 4
        %v648 = vadd.f32 %v639, %v646
        %vm649 = vcmp.lt.f32.partialorder %v648, %v615
        %v650 = vsel %vm649, %v648, %v615
        %v651 = vsel %vm649, 10, %v616
        %s652 = sld [smem:[#allocation2 + $0x580]]
        %v653 = vstv %s652
        %v654 = vsub.f32 %v267, %v653
        %v655 = vmul.f32 %v654, %v654
        %v656 = vadd.f32 %v655, 0.0
        %s657 = sld [smem:[#allocation2 + $0x581]]
        %v658 = vstv %s657
        %v659 = vsub.f32 %v267, %v658
        %v660 = vmul.f32 %v659, %v659
        %v662 = vrot.slane %v660, 5
        %v663 = vrot.slane %v662, 4
        %v665 = vadd.f32 %v656, %v663
        %s666 = sld [smem:[#allocation2 + $0x582]]
        %v667 = vstv %s666
        %v668 = vsub.f32 %v267, %v667
        %v669 = vmul.f32 %v668, %v668
        %v671 = vrot.slane %v669, 6
        %v672 = vrot.slane %v671, 4
        %v674 = vadd.f32 %v665, %v672
        %s675 = sld [smem:[#allocation2 + $0x583]]
        %v676 = vstv %s675
        %v677 = vsub.f32 %v267, %v676
        %v678 = vmul.f32 %v677, %v677
        %v680 = vrot.slane %v678, 7
        %v681 = vrot.slane %v680, 4
        %v683 = vadd.f32 %v674, %v681
        %vm684 = vcmp.lt.f32.partialorder %v683, %v650
        %v685 = vsel %vm684, %v683, %v650
        %v686 = vsel %vm684, 11, %v651
        %s687 = sld [smem:[#allocation2 + $0x600]]
        %v688 = vstv %s687
        %v689 = vsub.f32 %v267, %v688
        %v690 = vmul.f32 %v689, %v689
        %v691 = vadd.f32 %v690, 0.0
        %s692 = sld [smem:[#allocation2 + $0x601]]
        %v693 = vstv %s692
        %v694 = vsub.f32 %v267, %v693
        %v695 = vmul.f32 %v694, %v694
        %v697 = vrot.slane %v695, 5
        %v698 = vrot.slane %v697, 4
        %v700 = vadd.f32 %v691, %v698
        %s701 = sld [smem:[#allocation2 + $0x602]]
        %v702 = vstv %s701
        %v703 = vsub.f32 %v267, %v702
        %v704 = vmul.f32 %v703, %v703
        %v706 = vrot.slane %v704, 6
        %v707 = vrot.slane %v706, 4
        %v709 = vadd.f32 %v700, %v707
        %s710 = sld [smem:[#allocation2 + $0x603]]
        %v711 = vstv %s710
        %v712 = vsub.f32 %v267, %v711
        %v713 = vmul.f32 %v712, %v712
        %v715 = vrot.slane %v713, 7
        %v716 = vrot.slane %v715, 4
        %v718 = vadd.f32 %v709, %v716
        %vm719 = vcmp.lt.f32.partialorder %v718, %v685
        %v720 = vsel %vm719, %v718, %v685
        %v721 = vsel %vm719, 12, %v686
        %s722 = sld [smem:[#allocation2 + $0x680]]
        %v723 = vstv %s722
        %v724 = vsub.f32 %v267, %v723
        %v725 = vmul.f32 %v724, %v724
        %v726 = vadd.f32 %v725, 0.0
        %s727 = sld [smem:[#allocation2 + $0x681]]
        %v728 = vstv %s727
        %v729 = vsub.f32 %v267, %v728
        %v730 = vmul.f32 %v729, %v729
        %v732 = vrot.slane %v730, 5
        %v733 = vrot.slane %v732, 4
        %v735 = vadd.f32 %v726, %v733
        %s736 = sld [smem:[#allocation2 + $0x682]]
        %v737 = vstv %s736
        %v738 = vsub.f32 %v267, %v737
        %v739 = vmul.f32 %v738, %v738
        %v741 = vrot.slane %v739, 6
        %v742 = vrot.slane %v741, 4
        %v744 = vadd.f32 %v735, %v742
        %s745 = sld [smem:[#allocation2 + $0x683]]
        %v746 = vstv %s745
        %v747 = vsub.f32 %v267, %v746
        %v748 = vmul.f32 %v747, %v747
        %v750 = vrot.slane %v748, 7
        %v751 = vrot.slane %v750, 4
        %v753 = vadd.f32 %v744, %v751
        %vm754 = vcmp.lt.f32.partialorder %v753, %v720
        %v755 = vsel %vm754, %v753, %v720
        %v756 = vsel %vm754, 13, %v721
        %s757 = sld [smem:[#allocation2 + $0x700]]
        %v758 = vstv %s757
        %v759 = vsub.f32 %v267, %v758
        %v760 = vmul.f32 %v759, %v759
        %v761 = vadd.f32 %v760, 0.0
        %s762 = sld [smem:[#allocation2 + $0x701]]
        %v763 = vstv %s762
        %v764 = vsub.f32 %v267, %v763
        %v765 = vmul.f32 %v764, %v764
        %v767 = vrot.slane %v765, 5
        %v768 = vrot.slane %v767, 4
        %v770 = vadd.f32 %v761, %v768
        %s771 = sld [smem:[#allocation2 + $0x702]]
        %v772 = vstv %s771
        %v773 = vsub.f32 %v267, %v772
        %v774 = vmul.f32 %v773, %v773
        %v776 = vrot.slane %v774, 6
        %v777 = vrot.slane %v776, 4
        %v779 = vadd.f32 %v770, %v777
        %s780 = sld [smem:[#allocation2 + $0x703]]
        %v781 = vstv %s780
        %v782 = vsub.f32 %v267, %v781
        %v783 = vmul.f32 %v782, %v782
        %v785 = vrot.slane %v783, 7
        %v786 = vrot.slane %v785, 4
        %v788 = vadd.f32 %v779, %v786
        %vm789 = vcmp.lt.f32.partialorder %v788, %v755
        %v790 = vsel %vm789, %v788, %v755
        %v791 = vsel %vm789, 14, %v756
        %s792 = sld [smem:[#allocation2 + $0x780]]
        %v793 = vstv %s792
        %v794 = vsub.f32 %v267, %v793
        %v795 = vmul.f32 %v794, %v794
        %v796 = vadd.f32 %v795, 0.0
        %s797 = sld [smem:[#allocation2 + $0x781]]
        %v798 = vstv %s797
        %v799 = vsub.f32 %v267, %v798
        %v800 = vmul.f32 %v799, %v799
        %v802 = vrot.slane %v800, 5
        %v803 = vrot.slane %v802, 4
        %v805 = vadd.f32 %v796, %v803
        %s806 = sld [smem:[#allocation2 + $0x782]]
        %v807 = vstv %s806
        %v808 = vsub.f32 %v267, %v807
        %v809 = vmul.f32 %v808, %v808
        %v811 = vrot.slane %v809, 6
        %v812 = vrot.slane %v811, 4
        %v814 = vadd.f32 %v805, %v812
        %s815 = sld [smem:[#allocation2 + $0x783]]
        %v816 = vstv %s815
        %v817 = vsub.f32 %v267, %v816
        %v818 = vmul.f32 %v817, %v817
        %v820 = vrot.slane %v818, 7
        %v821 = vrot.slane %v820, 4
        %v823 = vadd.f32 %v814, %v821
        %vm824 = vcmp.lt.f32.partialorder %v823, %v790
        %v825 = vsel %vm824, %v823, %v790
        %v826 = vsel %vm824, 15, %v791
        %vm827 = vcmp.eq.s32.totalorder %v826, 0
        %v828 = vsel %vm827, %v269, 0.0
        %vm829 = vcmp.eq.s32.totalorder %v826, 1
        %v830 = vsel %vm829, %v303, %v828
        %vm831 = vcmp.eq.s32.totalorder %v826, 2
        %v832 = vsel %vm831, %v338, %v830
        %vm833 = vcmp.eq.s32.totalorder %v826, 3
        %v834 = vsel %vm833, %v373, %v832
        %vm835 = vcmp.eq.s32.totalorder %v826, 4
        %v836 = vsel %vm835, %v408, %v834
        %vm837 = vcmp.eq.s32.totalorder %v826, 5
        %v838 = vsel %vm837, %v443, %v836
        %vm839 = vcmp.eq.s32.totalorder %v826, 6
        %v840 = vsel %vm839, %v478, %v838
        %vm841 = vcmp.eq.s32.totalorder %v826, 7
        %v842 = vsel %vm841, %v513, %v840
        %vm843 = vcmp.eq.s32.totalorder %v826, 8
        %v844 = vsel %vm843, %v548, %v842
        %vm845 = vcmp.eq.s32.totalorder %v826, 9
        %v846 = vsel %vm845, %v583, %v844
        %vm847 = vcmp.eq.s32.totalorder %v826, 10
        %v848 = vsel %vm847, %v618, %v846
        %vm849 = vcmp.eq.s32.totalorder %v826, 11
        %v850 = vsel %vm849, %v653, %v848
        %vm851 = vcmp.eq.s32.totalorder %v826, 12
        %v852 = vsel %vm851, %v688, %v850
        %vm853 = vcmp.eq.s32.totalorder %v826, 13
        %v854 = vsel %vm853, %v723, %v852
        %vm855 = vcmp.eq.s32.totalorder %v826, 14
        %v856 = vsel %vm855, %v758, %v854
        %vm857 = vcmp.eq.s32.totalorder %v826, 15
        %v858 = vsel %vm857, %v793, %v856
        %v859 = vsel %vm827, %v274, 0.0
        %v860 = vsel %vm829, %v308, %v859
        %v861 = vsel %vm831, %v343, %v860
        %v862 = vsel %vm833, %v378, %v861
        %v863 = vsel %vm835, %v413, %v862
        %v864 = vsel %vm837, %v448, %v863
        %v865 = vsel %vm839, %v483, %v864
        %v866 = vsel %vm841, %v518, %v865
        %v867 = vsel %vm843, %v553, %v866
        %v868 = vsel %vm845, %v588, %v867
        %v869 = vsel %vm847, %v623, %v868
        %v870 = vsel %vm849, %v658, %v869
        %v871 = vsel %vm851, %v693, %v870
        %v872 = vsel %vm853, %v728, %v871
        %v873 = vsel %vm855, %v763, %v872
        %v874 = vsel %vm857, %v798, %v873
        %v875 = vsel %vm827, %v283, 0.0
        %v876 = vsel %vm829, %v317, %v875
        %v877 = vsel %vm831, %v352, %v876
        %v878 = vsel %vm833, %v387, %v877
        %v879 = vsel %vm835, %v422, %v878
        %v880 = vsel %vm837, %v457, %v879
        %v881 = vsel %vm839, %v492, %v880
        %v882 = vsel %vm841, %v527, %v881
        %v883 = vsel %vm843, %v562, %v882
        %v884 = vsel %vm845, %v597, %v883
        %v885 = vsel %vm847, %v632, %v884
        %v886 = vsel %vm849, %v667, %v885
        %v887 = vsel %vm851, %v702, %v886
        %v888 = vsel %vm853, %v737, %v887
        %v889 = vsel %vm855, %v772, %v888
        %v890 = vsel %vm857, %v807, %v889
        %v891 = vsel %vm827, %v292, 0.0
        %v892 = vsel %vm829, %v326, %v891
        %v893 = vsel %vm831, %v361, %v892
        %v894 = vsel %vm833, %v396, %v893
        %v895 = vsel %vm835, %v431, %v894
        %v896 = vsel %vm837, %v466, %v895
        %v897 = vsel %vm839, %v501, %v896
        %v898 = vsel %vm841, %v536, %v897
        %v899 = vsel %vm843, %v571, %v898
        %v900 = vsel %vm845, %v606, %v899
        %v901 = vsel %vm847, %v641, %v900
        %v902 = vsel %vm849, %v676, %v901
        %v903 = vsel %vm851, %v711, %v902
        %v904 = vsel %vm853, %v746, %v903
        %v905 = vsel %vm855, %v781, %v904
        %v906 = vsel %vm857, %v816, %v905
        %v908 = vlaneseq
        %v909 = vshrl.u32 %v908, 7
        %v910 = vsub.s32 0, %v909
        %v911 = vrot.slane %v858, %v910
        %v912 = vlaneseq
        %v913 = vshrl.u32 %v912, 7
        %v914 = vsub.s32 4, %v913
        %v915 = vrot.slane %v858, %v914
        %v919 = vlaneseq
        %v920 = vshrl.u32 %v919, 7
        %v921 = vsub.s32 0, %v920
        %v922 = vrot.slane %v874, %v921
        %v923 = vlaneseq
        %v924 = vshrl.u32 %v923, 7
        %v925 = vsub.s32 4, %v924
        %v926 = vrot.slane %v874, %v925
        %v930 = vlaneseq
        %v931 = vshrl.u32 %v930, 7
        %v932 = vsub.s32 0, %v931
        %v933 = vrot.slane %v890, %v932
        %v934 = vlaneseq
        %v935 = vshrl.u32 %v934, 7
        %v936 = vsub.s32 4, %v935
        %v937 = vrot.slane %v890, %v936
        %v941 = vlaneseq
        %v942 = vshrl.u32 %v941, 7
        %v943 = vsub.s32 0, %v942
        %v944 = vrot.slane %v906, %v943
        %v945 = vlaneseq
        %v946 = vshrl.u32 %v945, 7
        %v947 = vsub.s32 4, %v946
        %v948 = vrot.slane %v906, %v947
        %vm951 = vcmask 1040384
        %v952 = vsel %vm951, %v911, %v922
        %v953 = vsel %vm951, %v915, %v926
        %vm954 = vcmask 1041408
        %v955 = vsel %vm954, %v952, %v933
        %v956 = vsel %vm954, %v953, %v937
        %vm957 = vcmask 1042432
        %v958 = vsel %vm957, %v955, %v944
        %v959 = vsel %vm957, %v956, %v948
        %v962 = vcombine.low %v958, %v959
        %964 = vst [vmem:[%s239] sm:$0xff] %v962
        %v966 = vunpack.c.l.s4 1966171168
        %v967 = vunpack.c.0.s8 %v966
        %v968 = vlaneseq
        %v969 = vshrl.u32 %v968, 7
        %v970 = vsub.s32 %v967, %v969
        %v971 = vrot.slane %v826, %v970
        %v973 = vunpack.c.l.s4 1966171168
        %v974 = vunpack.c.0.s8 %v973
        %v975 = vlaneseq
        %v976 = vshrl.u32 %v975, 7
        %v977 = vsub.s32 %v974, %v976
        %v978 = vrot.slane %v971, %v977
        %v979 = vlaneseq
        %vm980 = vcmp.ge.s32.totalorder %v979, 0
        %vm981 = vcmp.lt.s32.totalorder %v979, 256
        %vm982 = vmand %vm980, %vm981
        %983 = vst.msk [vmem:[%s246] sm:$0x3] %vm982, %v978
        %v986 = vunpack.c.l.s4 1966171168
        %v987 = vunpack.c.0.s8 %v986
        %v988 = vlaneseq
        %v989 = vshrl.u32 %v988, 7
        %v990 = vsub.s32 %v987, %v989
        %v991 = vrot.slane %v825, %v990
        %v993 = vunpack.c.l.s4 1966171168
        %v994 = vunpack.c.0.s8 %v993
        %v995 = vlaneseq
        %v996 = vshrl.u32 %v995, 7
        %v997 = vsub.s32 %v994, %v996
        %v998 = vrot.slane %v991, %v997
        %1000 = vst.msk [vmem:[%s253] sm:$0x3] %vm982, %v998
        %s1001 = sand.u32 %s94, 1
        %s1002 = scalar_lea.sflag [#allocation3], %s1001
        %s1003 = sand.u32 %s94, 1
        %s1004 = smul.addr %s1003, 8
        %s1005 = scalar_lea.vmem [#allocation5], %s1004
        %s1006 = sand.u32 %s23, 1
        %s1007 = scalar_lea.sflag [#allocation7], %s1006
        %s1008 = sand.u32 %s122, 1
        %s1009 = smul.addr %s1008, 2
        %s1010 = scalar_lea.vmem [#allocation6], %s1009
        %s1011 = sand.u32 %s23, 1
        %s1012 = scalar_lea.sflag [#allocation7], %s1011
        %s1013 = sand.u32 %s150, 1
        %s1014 = smul.addr %s1013, 2
        %s1015 = scalar_lea.vmem [#allocation8], %s1014
        // Predicated region
        $region33: #{tpu_custom_call.1} parent=27 // pred_check
          %p1016 = pneg %p104
        $region34: #{tpu_custom_call.1} parent=27 // pred_check_branch
          %1018 = sbr.rel (%p1016) target = $region36
        $region35: #{tpu_custom_call.1} parent=27 // pred_region
          %s1019 = smul.u32 2, %s28
          %s1021 = ssub.s32 128, 128
          %1022 = vsyncadd %s1002, %s1021
          %s1023 = smul.addr %s27, 2
          %s1024 = sadd.s32 %s1019, %s1023
          %s1025 = smul.addr %s1024, 64
          %s1026 = scalar_lea.hbm %s2, %s1025
          %s1028 = sshll.u32 %s1005, 4
          %s1029 = int_to_ptr.vmem [resolvable:$true] %s1028
          %1031 = dma.vmem_to_hbm [thread:$0]  %s1029, 128, %s1026, %s1002
        $region36: #{tpu_custom_call.1} parent=27 // pred_fallthru
          _
        // Predicated region
        $region37: #{tpu_custom_call.1} parent=27 // pred_check
          %p1032 = pneg %p132
        $region38: #{tpu_custom_call.1} parent=27 // pred_check_branch
          %1034 = sbr.rel (%p1032) target = $region40
        $region39: #{tpu_custom_call.1} parent=27 // pred_region
          %s1035 = smul.u32 2, %s28
          %s1037 = ssub.s32 32, 32
          %1038 = vsyncadd %s1007, %s1037
          %s1039 = smul.addr %s27, 2
          %s1040 = sadd.s32 %s1035, %s1039
          %s1041 = smul.addr %s1040, 16
          %s1042 = scalar_lea.hbm %s3, %s1041
          %s1044 = sshll.u32 %s1010, 4
          %s1045 = int_to_ptr.vmem [resolvable:$true] %s1044
          %1047 = dma.vmem_to_hbm [thread:$0]  %s1045, 32, %s1042, %s1007
        $region40: #{tpu_custom_call.1} parent=27 // pred_fallthru
          _
        // Predicated region
        $region41: #{tpu_custom_call.1} parent=27 // pred_check
          %p1048 = pneg %p160
        $region42: #{tpu_custom_call.1} parent=27 // pred_check_branch
          %1050 = sbr.rel (%p1048) target = $region44
        $region43: #{tpu_custom_call.1} parent=27 // pred_region
          %s1051 = smul.u32 2, %s28
          %s1053 = ssub.s32 32, 32
          %1054 = vsyncadd %s1012, %s1053
          %s1055 = smul.addr %s27, 2
          %s1056 = sadd.s32 %s1051, %s1055
          %s1057 = smul.addr %s1056, 16
          %s1058 = scalar_lea.hbm %s4, %s1057
          %s1060 = sshll.u32 %s1015, 4
          %s1061 = int_to_ptr.vmem [resolvable:$true] %s1060
          %1063 = dma.vmem_to_hbm [thread:$0]  %s1061, 32, %s1058, %s1012
        $region44: #{tpu_custom_call.1} parent=27 // pred_fallthru
          _
      $region28: #{tpu_custom_call.1} parent=5 // pred_fallthru
        _
      %p1064 = scmp.le.s32.totalorder 2, %s18
      // Predicated region
      $region45: #{tpu_custom_call.1} parent=5 // pred_check
        %p1065 = pneg %p1064
      $region46: #{tpu_custom_call.1} parent=5 // pred_check_branch
        %1067 = sbr.rel (%p1065) target = $region48
      $region47: #{tpu_custom_call.1} parent=5 // pred_region
        %s1068 = ssub.s32 %s18, 2
        // Predicated region
        $region49: #{tpu_custom_call.1} parent=47 // pred_check
          %p1069 = pneg %p110
        $region50: #{tpu_custom_call.1} parent=47 // pred_check_branch
          %1071 = sbr.rel (%p1069) target = $region52
        $region51: #{tpu_custom_call.1} parent=47 // pred_region
          %s1072 = sand.u32 %s95, 1
          %s1073 = scalar_lea.sflag [#allocation3], %s1072
          %s1074 = sand.u32 %s95, 1
          %s1075 = smul.addr %s1074, 8
          %s1076 = scalar_lea.vmem [#allocation5], %s1075
          %1077 = dma.done %s1073, 128
        $region52: #{tpu_custom_call.1} parent=47 // pred_fallthru
          _
        // Predicated region
        $region53: #{tpu_custom_call.1} parent=47 // pred_check
          %p1078 = pneg %p138
        $region54: #{tpu_custom_call.1} parent=47 // pred_check_branch
          %1080 = sbr.rel (%p1078) target = $region56
        $region55: #{tpu_custom_call.1} parent=47 // pred_region
          %s1081 = sand.u32 %s24, 1
          %s1082 = scalar_lea.sflag [#allocation7], %s1081
          %s1083 = sand.u32 %s123, 1
          %s1084 = smul.addr %s1083, 2
          %s1085 = scalar_lea.vmem [#allocation6], %s1084
          %1086 = dma.done %s1082, 32
        $region56: #{tpu_custom_call.1} parent=47 // pred_fallthru
          _
        // Predicated region
        $region57: #{tpu_custom_call.1} parent=47 // pred_check
          %p1087 = pneg %p166
        $region58: #{tpu_custom_call.1} parent=47 // pred_check_branch
          %1089 = sbr.rel (%p1087) target = $region60
        $region59: #{tpu_custom_call.1} parent=47 // pred_region
          %s1090 = sand.u32 %s24, 1
          %s1091 = scalar_lea.sflag [#allocation7], %s1090
          %s1092 = sand.u32 %s151, 1
          %s1093 = smul.addr %s1092, 2
          %s1094 = scalar_lea.vmem [#allocation8], %s1093
          %1095 = dma.done %s1091, 32
        $region60: #{tpu_custom_call.1} parent=47 // pred_fallthru
          _
      $region48: #{tpu_custom_call.1} parent=5 // pred_fallthru
        _
    $region6: #{tpu_custom_call.1} parent=1 // loop_footer
      %s22 = sadd.s32 1, %s18
    $region7: #{tpu_custom_call.1} parent=1 // loop_footer_branch
      %17 = sbr.rel target = $region3
    $region8: #{tpu_custom_call.1} parent=1 // loop_exit
      _
    %1096 = vsyncpa [#allocation3], 1
    %s1097 = scalar_lea.sflag [#allocation3], 1
    %1098 = vsyncpa %s1097, 1
    %1099 = vsyncpa [#allocation7], 1
    %s1100 = scalar_lea.sflag [#allocation7], 1
    %1101 = vsyncpa %s1100, 1
    %1102 = vsyncpa [#allocation4], 1
    %s1103 = scalar_lea.sflag [#allocation4], 1
    %1104 = vsyncpa %s1103, 1

</llo_original>
